<compile_context>
chip_gen: v7x
topology: tpu7x:2x2x1
jax: 0.10.0
libtpu: 0.0.40
codegen_flags: <defaults>
</compile_context>

<pallas_src>
import math

import jax
import jax.numpy as jnp
from jax.experimental import pallas as pl
from jax.experimental.pallas import tpu as pltpu

# ---- config (small, consistent with the module) ----
B = 2            # batch
T = 8            # sequence length (== block_size here)
C = 32           # n_embd
N_HEAD = 4
HEAD_DIM = C // N_HEAD
DROPOUT_P = 0.0  # TODO(synk): dropout==0.0 so attn/resid dropout are identity; no PRNG path in-kernel.

_NEG_BIG = -1e30  # finite "-inf" for the causal mask (NaN-safe if fully-masked rows ever appear)


def _fused_csa_kernel(x_ref, wa_ref, ba_ref, wp_ref, bp_ref, o_ref):
    """Whole CausalSelfAttention forward for one batch row.

    Block shapes:
      x_ref  : (1, T, C)
      wa_ref : (C, 3C)   ba_ref : (1, 3C)
      wp_ref : (C, C)    bp_ref : (1, C)
      o_ref  : (1, T, C)
    """
    x = x_ref[0]                        # (T, C), f32
    wa = wa_ref[...]
    wp = wp_ref[...]

    t, c = x.shape                      # static
    scale = 1.0 / math.sqrt(HEAD_DIM)

    # ---- c_attn: qkv = x @ Wa + ba -> (T, 3C), stays in VMEM/vregs ----
    qkv = jnp.dot(x, wa, preferred_element_type=jnp.float32) + ba_ref[...]

    # ---- causal mask (shared by all heads) ----
    row = jax.lax.broadcasted_iota(jnp.int32, (t, t), 0)
    col = jax.lax.broadcasted_iota(jnp.int32, (t, t), 1)
    causal = col <= row

    # ---- attention per head; c_proj accumulated into one lane-dense (T, C) slab ----
    # out = bp + sum_h softmax(mask(q_h k_h^T * scale)) v_h @ Wp[h*hd:(h+1)*hd, :]
    out = jnp.zeros((t, c), dtype=jnp.float32)
    for h in range(N_HEAD):             # static unroll over 4 heads (no grid overhead)
        lo = h * HEAD_DIM
        hi = lo + HEAD_DIM
        q_h = qkv[:, lo:hi]                     # (T, hd)  static lane slice
        k_h = qkv[:, c + lo:c + hi]             # (T, hd)
        v_h = qkv[:, 2 * c + lo:2 * c + hi]     # (T, hd)

        att = jnp.dot(q_h, k_h.T, preferred_element_type=jnp.float32) * scale
        att = jnp.where(causal, att, _NEG_BIG)

        # numerically stable softmax; reciprocal on EUP slot + one NR step for accuracy
        m = jnp.max(att, axis=-1, keepdims=True)
        p = jnp.exp(att - m)
        denom = jnp.sum(p, axis=-1, keepdims=True)
        r = pl.reciprocal(denom, approx=True)
        r = r * (2.0 - denom * r)               # Newton-Raphson refinement
        p = p * r

        y_h = jnp.dot(p, v_h, preferred_element_type=jnp.float32)          # (T, hd)
        out = out + jnp.dot(y_h, wp[lo:hi, :],
                            preferred_element_type=jnp.float32)            # (T, C)

    out = out + bp_ref[...]
    o_ref[0] = out.astype(o_ref.dtype)          # single lane-dense (T, C) store
    # TODO(synk): at production sizes (T>=1024, C>=768) restructure as a flash-style
    # kernel (tiled q/kv grid, online-softmax scratch, 128/256-wide bf16 MXU tiles).


def causal_self_attention(x, w_attn, b_attn, w_proj, b_proj):
    """x: (B, T, C); weights pre-transposed to (in, out)."""
    Bx, Tx, Cx = x.shape
    return pl.pallas_call(
        _fused_csa_kernel,
        out_shape=jax.ShapeDtypeStruct((Bx, Tx, Cx), x.dtype),
        grid=(Bx,),
        in_specs=[
            pl.BlockSpec((1, Tx, Cx), lambda b: (b, 0, 0)),       # x
            pl.BlockSpec((Cx, 3 * Cx), lambda b: (0, 0)),         # w_attn (fetched once)
            pl.BlockSpec((1, 3 * Cx), lambda b: (0, 0)),          # b_attn
            pl.BlockSpec((Cx, Cx), lambda b: (0, 0)),             # w_proj
            pl.BlockSpec((1, Cx), lambda b: (0, 0)),              # b_proj
        ],
        out_specs=pl.BlockSpec((1, Tx, Cx), lambda b: (b, 0, 0)),
        compiler_params=pltpu.CompilerParams(
            dimension_semantics=("parallel",)),
    )(x, w_attn, b_attn.reshape(1, 3 * Cx), w_proj, b_proj.reshape(1, Cx))


if __name__ == "__main__":
    key = jax.random.PRNGKey(0)
    kx, k1, k2, k3, k4 = jax.random.split(key, 5)

    x = jax.random.normal(kx, (B, T, C), dtype=jnp.float32)

    # deterministic parameters (nn.Linear(C, 3C) / nn.Linear(C, C), stored as (in, out))
    w_attn = 0.02 * jax.random.normal(k1, (C, 3 * C), dtype=jnp.float32)
    b_attn = 0.01 * jax.random.normal(k2, (3 * C,), dtype=jnp.float32)
    w_proj = 0.02 * jax.random.normal(k3, (C, C), dtype=jnp.float32)
    b_proj = 0.01 * jax.random.normal(k4, (C,), dtype=jnp.float32)

    out = causal_self_attention(x, w_attn, b_attn, w_proj, b_proj)
    out = jax.block_until_ready(out)

    # sanity check against a pure-JAX reference of the same math
    def ref(x):
        qkv = x.reshape(B * T, C) @ w_attn + b_attn
        q, k, v = jnp.split(qkv.reshape(B, T, 3 * C), 3, axis=2)
        q = q.reshape(B, T, N_HEAD, HEAD_DIM).transpose(0, 2, 1, 3)
        k = k.reshape(B, T, N_HEAD, HEAD_DIM).transpose(0, 2, 1, 3)
        v = v.reshape(B, T, N_HEAD, HEAD_DIM).transpose(0, 2, 1, 3)
        att = jnp.einsum("bhqd,bhkd->bhqk", q, k) / math.sqrt(HEAD_DIM)
        mask = jnp.tril(jnp.ones((T, T), dtype=bool))
        att = jnp.where(mask, att, -jnp.inf)
        att = jax.nn.softmax(att, axis=-1)
        y = jnp.einsum("bhqk,bhkd->bhqd", att, v)
        y = y.transpose(0, 2, 1, 3).reshape(B, T, C)
        return (y.reshape(B * T, C) @ w_proj + b_proj).reshape(B, T, C)

    assert jnp.allclose(out, ref(x), atol=1e-3, rtol=1e-3), "mismatch vs reference"
    print("KERNEL_OK")
</pallas_src>

<mosaic_0001>
module attributes {stable_mosaic.version = 11 : i64} {
  func.func @_fused_csa_kernel(%arg0: i32, %arg1: memref<1x8x32xf32, #tpu.memory_space<vmem>>, %arg2: memref<32x96xf32, #tpu.memory_space<vmem>>, %arg3: memref<1x96xf32, #tpu.memory_space<vmem>>, %arg4: memref<32x32xf32, #tpu.memory_space<vmem>>, %arg5: memref<1x32xf32, #tpu.memory_space<vmem>>, %arg6: memref<1x8x32xf32, #tpu.memory_space<vmem>>) attributes {dimension_semantics = [#tpu.dimension_semantics<parallel>], iteration_bounds = array<i64: 2>, scalar_prefetch = 0 : i64, scratch_operands = 0 : i64, tpu.core_type = #tpu.core_type<tc>, window_params = [{transform_indices = @transform_0, window_bounds = array<i64: 1, 8, 32>}, {pipeline_mode = #tpu.pipeline_mode<synchronous>, transform_indices = @transform_1, window_bounds = array<i64: 32, 96>}, {pipeline_mode = #tpu.pipeline_mode<synchronous>, transform_indices = @transform_2, window_bounds = array<i64: 1, 96>}, {pipeline_mode = #tpu.pipeline_mode<synchronous>, transform_indices = @transform_3, window_bounds = array<i64: 32, 32>}, {pipeline_mode = #tpu.pipeline_mode<synchronous>, transform_indices = @transform_4, window_bounds = array<i64: 1, 32>}, {transform_indices = @transform_5, window_bounds = array<i64: 1, 8, 32>}]} {
    %c0 = arith.constant 0 : index
    %c0_0 = arith.constant 0 : index
    %c0_1 = arith.constant 0 : index
    %0 = vector.load %arg1[%c0, %c0_0, %c0_1] : memref<1x8x32xf32, #tpu.memory_space<vmem>>, vector<1x8x32xf32>
    %1 = vector.shape_cast %0 : vector<1x8x32xf32> to vector<8x32xf32>
    %c0_2 = arith.constant 0 : index
    %c0_3 = arith.constant 0 : index
    %2 = vector.load %arg2[%c0_2, %c0_3] : memref<32x96xf32, #tpu.memory_space<vmem>>, vector<32x96xf32>
    %c0_4 = arith.constant 0 : index
    %c0_5 = arith.constant 0 : index
    %3 = vector.load %arg4[%c0_4, %c0_5] : memref<32x32xf32, #tpu.memory_space<vmem>>, vector<32x32xf32>
    %cst = arith.constant dense<0.000000e+00> : vector<8x96xf32>
    %4 = tpu.matmul %1, %2, %cst {dimension_numbers = #tpu.dot_dimension_numbers<[1], [0], [0], [1], [0, 0, 1, 1], [], []>} : vector<8x32xf32>, vector<32x96xf32>, vector<8x96xf32> -> vector<8x96xf32>
    %c0_6 = arith.constant 0 : index
    %c0_7 = arith.constant 0 : index
    %5 = vector.load %arg3[%c0_6, %c0_7] : memref<1x96xf32, #tpu.memory_space<vmem>>, vector<1x96xf32>
    %6 = vector.broadcast %5 : vector<1x96xf32> to vector<8x96xf32>
    %7 = arith.addf %4, %6 : vector<8x96xf32>
    %8 = tpu.iota {dimensions = array<i32: 0>} : vector<8x8xi32>
    %9 = tpu.iota {dimensions = array<i32: 1>} : vector<8x8xi32>
    %10 = arith.cmpi sle, %9, %8 : vector<8x8xi32>
    %cst_8 = arith.constant 0.000000e+00 : f32
    %11 = vector.broadcast %cst_8 : f32 to vector<8x32xf32>
    %12 = vector.extract_strided_slice %7 {offsets = [0, 0], sizes = [8, 8], strides = [1, 1]} : vector<8x96xf32> to vector<8x8xf32>
    %13 = vector.extract_strided_slice %7 {offsets = [0, 32], sizes = [8, 8], strides = [1, 1]} : vector<8x96xf32> to vector<8x8xf32>
    %14 = vector.extract_strided_slice %7 {offsets = [0, 64], sizes = [8, 8], strides = [1, 1]} : vector<8x96xf32> to vector<8x8xf32>
    %15 = tpu.transpose %13, [1, 0] : vector<8x8xf32> -> vector<8x8xf32>
    %cst_9 = arith.constant dense<0.000000e+00> : vector<8x8xf32>
    %16 = tpu.matmul %12, %15, %cst_9 {dimension_numbers = #tpu.dot_dimension_numbers<[1], [0], [0], [1], [0, 0, 1, 1], [], []>} : vector<8x8xf32>, vector<8x8xf32>, vector<8x8xf32> -> vector<8x8xf32>
    %cst_10 = arith.constant 0.353553385 : f32
    %17 = vector.broadcast %cst_10 : f32 to vector<8x8xf32>
    %18 = arith.mulf %16, %17 : vector<8x8xf32>
    %cst_11 = arith.constant -1.000000e+30 : f32
    %19 = vector.broadcast %cst_11 : f32 to vector<8x8xf32>
    %20 = arith.select %10, %18, %19 : vector<8x8xi1>, vector<8x8xf32>
    %cst_12 = arith.constant dense<0xFF800000> : vector<8xf32>
    %21 = vector.multi_reduction <maximumf>, %20, %cst_12 [1] : vector<8x8xf32> to vector<8xf32>
    %22 = vector.shape_cast %21 : vector<8xf32> to vector<8x1xf32>
    %23 = vector.broadcast %22 : vector<8x1xf32> to vector<8x8xf32>
    %24 = arith.subf %20, %23 : vector<8x8xf32>
    %25 = math.exp %24 : vector<8x8xf32>
    %cst_13 = arith.constant dense<0.000000e+00> : vector<8xf32>
    %26 = vector.multi_reduction <add>, %25, %cst_13 [1] : vector<8x8xf32> to vector<8xf32>
    %27 = vector.shape_cast %26 : vector<8xf32> to vector<8x1xf32>
    %28 = tpu.reciprocal %27 {approx = true} : vector<8x1xf32> -> vector<8x1xf32>
    %29 = arith.mulf %27, %28 : vector<8x1xf32>
    %cst_14 = arith.constant 2.000000e+00 : f32
    %30 = vector.broadcast %cst_14 : f32 to vector<8x1xf32>
    %31 = arith.subf %30, %29 : vector<8x1xf32>
    %32 = arith.mulf %28, %31 : vector<8x1xf32>
    %33 = vector.broadcast %32 : vector<8x1xf32> to vector<8x8xf32>
    %34 = arith.mulf %25, %33 : vector<8x8xf32>
    %cst_15 = arith.constant dense<0.000000e+00> : vector<8x8xf32>
    %35 = tpu.matmul %34, %14, %cst_15 {dimension_numbers = #tpu.dot_dimension_numbers<[1], [0], [0], [1], [0, 0, 1, 1], [], []>} : vector<8x8xf32>, vector<8x8xf32>, vector<8x8xf32> -> vector<8x8xf32>
    %36 = vector.extract_strided_slice %3 {offsets = [0, 0], sizes = [8, 32], strides = [1, 1]} : vector<32x32xf32> to vector<8x32xf32>
    %cst_16 = arith.constant dense<0.000000e+00> : vector<8x32xf32>
    %37 = tpu.matmul %35, %36, %cst_16 {dimension_numbers = #tpu.dot_dimension_numbers<[1], [0], [0], [1], [0, 0, 1, 1], [], []>} : vector<8x8xf32>, vector<8x32xf32>, vector<8x32xf32> -> vector<8x32xf32>
    %38 = arith.addf %11, %37 : vector<8x32xf32>
    %39 = vector.extract_strided_slice %7 {offsets = [0, 8], sizes = [8, 8], strides = [1, 1]} : vector<8x96xf32> to vector<8x8xf32>
    %40 = vector.extract_strided_slice %7 {offsets = [0, 40], sizes = [8, 8], strides = [1, 1]} : vector<8x96xf32> to vector<8x8xf32>
    %41 = vector.extract_strided_slice %7 {offsets = [0, 72], sizes = [8, 8], strides = [1, 1]} : vector<8x96xf32> to vector<8x8xf32>
    %42 = tpu.transpose %40, [1, 0] : vector<8x8xf32> -> vector<8x8xf32>
    %cst_17 = arith.constant dense<0.000000e+00> : vector<8x8xf32>
    %43 = tpu.matmul %39, %42, %cst_17 {dimension_numbers = #tpu.dot_dimension_numbers<[1], [0], [0], [1], [0, 0, 1, 1], [], []>} : vector<8x8xf32>, vector<8x8xf32>, vector<8x8xf32> -> vector<8x8xf32>
    %cst_18 = arith.constant 0.353553385 : f32
    %44 = vector.broadcast %cst_18 : f32 to vector<8x8xf32>
    %45 = arith.mulf %43, %44 : vector<8x8xf32>
    %cst_19 = arith.constant -1.000000e+30 : f32
    %46 = vector.broadcast %cst_19 : f32 to vector<8x8xf32>
    %47 = arith.select %10, %45, %46 : vector<8x8xi1>, vector<8x8xf32>
    %cst_20 = arith.constant dense<0xFF800000> : vector<8xf32>
    %48 = vector.multi_reduction <maximumf>, %47, %cst_20 [1] : vector<8x8xf32> to vector<8xf32>
    %49 = vector.shape_cast %48 : vector<8xf32> to vector<8x1xf32>
    %50 = vector.broadcast %49 : vector<8x1xf32> to vector<8x8xf32>
    %51 = arith.subf %47, %50 : vector<8x8xf32>
    %52 = math.exp %51 : vector<8x8xf32>
    %cst_21 = arith.constant dense<0.000000e+00> : vector<8xf32>
    %53 = vector.multi_reduction <add>, %52, %cst_21 [1] : vector<8x8xf32> to vector<8xf32>
    %54 = vector.shape_cast %53 : vector<8xf32> to vector<8x1xf32>
    %55 = tpu.reciprocal %54 {approx = true} : vector<8x1xf32> -> vector<8x1xf32>
    %56 = arith.mulf %54, %55 : vector<8x1xf32>
    %cst_22 = arith.constant 2.000000e+00 : f32
    %57 = vector.broadcast %cst_22 : f32 to vector<8x1xf32>
    %58 = arith.subf %57, %56 : vector<8x1xf32>
    %59 = arith.mulf %55, %58 : vector<8x1xf32>
    %60 = vector.broadcast %59 : vector<8x1xf32> to vector<8x8xf32>
    %61 = arith.mulf %52, %60 : vector<8x8xf32>
    %cst_23 = arith.constant dense<0.000000e+00> : vector<8x8xf32>
    %62 = tpu.matmul %61, %41, %cst_23 {dimension_numbers = #tpu.dot_dimension_numbers<[1], [0], [0], [1], [0, 0, 1, 1], [], []>} : vector<8x8xf32>, vector<8x8xf32>, vector<8x8xf32> -> vector<8x8xf32>
    %63 = vector.extract_strided_slice %3 {offsets = [8, 0], sizes = [8, 32], strides = [1, 1]} : vector<32x32xf32> to vector<8x32xf32>
    %cst_24 = arith.constant dense<0.000000e+00> : vector<8x32xf32>
    %64 = tpu.matmul %62, %63, %cst_24 {dimension_numbers = #tpu.dot_dimension_numbers<[1], [0], [0], [1], [0, 0, 1, 1], [], []>} : vector<8x8xf32>, vector<8x32xf32>, vector<8x32xf32> -> vector<8x32xf32>
    %65 = arith.addf %38, %64 : vector<8x32xf32>
    %66 = vector.extract_strided_slice %7 {offsets = [0, 16], sizes = [8, 8], strides = [1, 1]} : vector<8x96xf32> to vector<8x8xf32>
    %67 = vector.extract_strided_slice %7 {offsets = [0, 48], sizes = [8, 8], strides = [1, 1]} : vector<8x96xf32> to vector<8x8xf32>
    %68 = vector.extract_strided_slice %7 {offsets = [0, 80], sizes = [8, 8], strides = [1, 1]} : vector<8x96xf32> to vector<8x8xf32>
    %69 = tpu.transpose %67, [1, 0] : vector<8x8xf32> -> vector<8x8xf32>
    %cst_25 = arith.constant dense<0.000000e+00> : vector<8x8xf32>
    %70 = tpu.matmul %66, %69, %cst_25 {dimension_numbers = #tpu.dot_dimension_numbers<[1], [0], [0], [1], [0, 0, 1, 1], [], []>} : vector<8x8xf32>, vector<8x8xf32>, vector<8x8xf32> -> vector<8x8xf32>
    %cst_26 = arith.constant 0.353553385 : f32
    %71 = vector.broadcast %cst_26 : f32 to vector<8x8xf32>
    %72 = arith.mulf %70, %71 : vector<8x8xf32>
    %cst_27 = arith.constant -1.000000e+30 : f32
    %73 = vector.broadcast %cst_27 : f32 to vector<8x8xf32>
    %74 = arith.select %10, %72, %73 : vector<8x8xi1>, vector<8x8xf32>
    %cst_28 = arith.constant dense<0xFF800000> : vector<8xf32>
    %75 = vector.multi_reduction <maximumf>, %74, %cst_28 [1] : vector<8x8xf32> to vector<8xf32>
    %76 = vector.shape_cast %75 : vector<8xf32> to vector<8x1xf32>
    %77 = vector.broadcast %76 : vector<8x1xf32> to vector<8x8xf32>
    %78 = arith.subf %74, %77 : vector<8x8xf32>
    %79 = math.exp %78 : vector<8x8xf32>
    %cst_29 = arith.constant dense<0.000000e+00> : vector<8xf32>
    %80 = vector.multi_reduction <add>, %79, %cst_29 [1] : vector<8x8xf32> to vector<8xf32>
    %81 = vector.shape_cast %80 : vector<8xf32> to vector<8x1xf32>
    %82 = tpu.reciprocal %81 {approx = true} : vector<8x1xf32> -> vector<8x1xf32>
    %83 = arith.mulf %81, %82 : vector<8x1xf32>
    %cst_30 = arith.constant 2.000000e+00 : f32
    %84 = vector.broadcast %cst_30 : f32 to vector<8x1xf32>
    %85 = arith.subf %84, %83 : vector<8x1xf32>
    %86 = arith.mulf %82, %85 : vector<8x1xf32>
    %87 = vector.broadcast %86 : vector<8x1xf32> to vector<8x8xf32>
    %88 = arith.mulf %79, %87 : vector<8x8xf32>
    %cst_31 = arith.constant dense<0.000000e+00> : vector<8x8xf32>
    %89 = tpu.matmul %88, %68, %cst_31 {dimension_numbers = #tpu.dot_dimension_numbers<[1], [0], [0], [1], [0, 0, 1, 1], [], []>} : vector<8x8xf32>, vector<8x8xf32>, vector<8x8xf32> -> vector<8x8xf32>
    %90 = vector.extract_strided_slice %3 {offsets = [16, 0], sizes = [8, 32], strides = [1, 1]} : vector<32x32xf32> to vector<8x32xf32>
    %cst_32 = arith.constant dense<0.000000e+00> : vector<8x32xf32>
    %91 = tpu.matmul %89, %90, %cst_32 {dimension_numbers = #tpu.dot_dimension_numbers<[1], [0], [0], [1], [0, 0, 1, 1], [], []>} : vector<8x8xf32>, vector<8x32xf32>, vector<8x32xf32> -> vector<8x32xf32>
    %92 = arith.addf %65, %91 : vector<8x32xf32>
    %93 = vector.extract_strided_slice %7 {offsets = [0, 24], sizes = [8, 8], strides = [1, 1]} : vector<8x96xf32> to vector<8x8xf32>
    %94 = vector.extract_strided_slice %7 {offsets = [0, 56], sizes = [8, 8], strides = [1, 1]} : vector<8x96xf32> to vector<8x8xf32>
    %95 = vector.extract_strided_slice %7 {offsets = [0, 88], sizes = [8, 8], strides = [1, 1]} : vector<8x96xf32> to vector<8x8xf32>
    %96 = tpu.transpose %94, [1, 0] : vector<8x8xf32> -> vector<8x8xf32>
    %cst_33 = arith.constant dense<0.000000e+00> : vector<8x8xf32>
    %97 = tpu.matmul %93, %96, %cst_33 {dimension_numbers = #tpu.dot_dimension_numbers<[1], [0], [0], [1], [0, 0, 1, 1], [], []>} : vector<8x8xf32>, vector<8x8xf32>, vector<8x8xf32> -> vector<8x8xf32>
    %cst_34 = arith.constant 0.353553385 : f32
    %98 = vector.broadcast %cst_34 : f32 to vector<8x8xf32>
    %99 = arith.mulf %97, %98 : vector<8x8xf32>
    %cst_35 = arith.constant -1.000000e+30 : f32
    %100 = vector.broadcast %cst_35 : f32 to vector<8x8xf32>
    %101 = arith.select %10, %99, %100 : vector<8x8xi1>, vector<8x8xf32>
    %cst_36 = arith.constant dense<0xFF800000> : vector<8xf32>
    %102 = vector.multi_reduction <maximumf>, %101, %cst_36 [1] : vector<8x8xf32> to vector<8xf32>
    %103 = vector.shape_cast %102 : vector<8xf32> to vector<8x1xf32>
    %104 = vector.broadcast %103 : vector<8x1xf32> to vector<8x8xf32>
    %105 = arith.subf %101, %104 : vector<8x8xf32>
    %106 = math.exp %105 : vector<8x8xf32>
    %cst_37 = arith.constant dense<0.000000e+00> : vector<8xf32>
    %107 = vector.multi_reduction <add>, %106, %cst_37 [1] : vector<8x8xf32> to vector<8xf32>
    %108 = vector.shape_cast %107 : vector<8xf32> to vector<8x1xf32>
    %109 = tpu.reciprocal %108 {approx = true} : vector<8x1xf32> -> vector<8x1xf32>
    %110 = arith.mulf %108, %109 : vector<8x1xf32>
    %cst_38 = arith.constant 2.000000e+00 : f32
    %111 = vector.broadcast %cst_38 : f32 to vector<8x1xf32>
    %112 = arith.subf %111, %110 : vector<8x1xf32>
    %113 = arith.mulf %109, %112 : vector<8x1xf32>
    %114 = vector.broadcast %113 : vector<8x1xf32> to vector<8x8xf32>
    %115 = arith.mulf %106, %114 : vector<8x8xf32>
    %cst_39 = arith.constant dense<0.000000e+00> : vector<8x8xf32>
    %116 = tpu.matmul %115, %95, %cst_39 {dimension_numbers = #tpu.dot_dimension_numbers<[1], [0], [0], [1], [0, 0, 1, 1], [], []>} : vector<8x8xf32>, vector<8x8xf32>, vector<8x8xf32> -> vector<8x8xf32>
    %117 = vector.extract_strided_slice %3 {offsets = [24, 0], sizes = [8, 32], strides = [1, 1]} : vector<32x32xf32> to vector<8x32xf32>
    %cst_40 = arith.constant dense<0.000000e+00> : vector<8x32xf32>
    %118 = tpu.matmul %116, %117, %cst_40 {dimension_numbers = #tpu.dot_dimension_numbers<[1], [0], [0], [1], [0, 0, 1, 1], [], []>} : vector<8x8xf32>, vector<8x32xf32>, vector<8x32xf32> -> vector<8x32xf32>
    %119 = arith.addf %92, %118 : vector<8x32xf32>
    %c0_41 = arith.constant 0 : index
    %c0_42 = arith.constant 0 : index
    %120 = vector.load %arg5[%c0_41, %c0_42] : memref<1x32xf32, #tpu.memory_space<vmem>>, vector<1x32xf32>
    %121 = vector.broadcast %120 : vector<1x32xf32> to vector<8x32xf32>
    %122 = arith.addf %119, %121 : vector<8x32xf32>
    %c0_43 = arith.constant 0 : index
    %c0_44 = arith.constant 0 : index
    %c0_45 = arith.constant 0 : index
    %123 = vector.load %arg6[%c0_43, %c0_44, %c0_45] : memref<1x8x32xf32, #tpu.memory_space<vmem>>, vector<1x8x32xf32>
    %124 = vector.shape_cast %123 : vector<1x8x32xf32> to vector<8x32xf32>
    %125 = vector.shape_cast %122 : vector<8x32xf32> to vector<1x8x32xf32>
    tpu.vector_store %arg6[%c0_43, %c0_44, %c0_45], %125 {strides = array<i32>} : memref<1x8x32xf32, #tpu.memory_space<vmem>>, vector<1x8x32xf32>,
    return
  }
  func.func @transform_0(%arg0: i32) -> (i32, i32, i32) {
    %c0_i32 = arith.constant 0 : i32
    %c0_i32_0 = arith.constant 0 : i32
    %c0_i32_1 = arith.constant 0 : i32
    return %arg0, %c0_i32, %c0_i32_0 : i32, i32, i32
  }
  func.func @transform_1(%arg0: i32) -> (i32, i32) {
    %c0_i32 = arith.constant 0 : i32
    %c0_i32_0 = arith.constant 0 : i32
    %c0_i32_1 = arith.constant 0 : i32
    return %c0_i32, %c0_i32_0 : i32, i32
  }
  func.func @transform_2(%arg0: i32) -> (i32, i32) {
    %c0_i32 = arith.constant 0 : i32
    %c0_i32_0 = arith.constant 0 : i32
    %c0_i32_1 = arith.constant 0 : i32
    return %c0_i32, %c0_i32_0 : i32, i32
  }
  func.func @transform_3(%arg0: i32) -> (i32, i32) {
    %c0_i32 = arith.constant 0 : i32
    %c0_i32_0 = arith.constant 0 : i32
    %c0_i32_1 = arith.constant 0 : i32
    return %c0_i32, %c0_i32_0 : i32, i32
  }
  func.func @transform_4(%arg0: i32) -> (i32, i32) {
    %c0_i32 = arith.constant 0 : i32
    %c0_i32_0 = arith.constant 0 : i32
    %c0_i32_1 = arith.constant 0 : i32
    return %c0_i32, %c0_i32_0 : i32, i32
  }
  func.func @transform_5(%arg0: i32) -> (i32, i32, i32) {
    %c0_i32 = arith.constant 0 : i32
    %c0_i32_0 = arith.constant 0 : i32
    %c0_i32_1 = arith.constant 0 : i32
    return %arg0, %c0_i32, %c0_i32_0 : i32, i32, i32
  }
}

</mosaic_0001>

<llo_original>
// kernel: tpu_custom_call.1
$region0: #{tpu_custom_call.1}
  #allocation0 [shape = 'u32[]', space=smem, size = 0x4, offset = 0x4, fixed_abs, tag = 'smem constant byte address 0x4 - core index']
  #allocation1 [shape = 'u32[144,128]{1,0:T(1,128)}', space=vmem, size = 0x12000, scoped, tag = 'internal scratch']
  %s0 = inlined_call_operand.hbm [shape: f32[2,8,32], index: 0, kind: input, shape index: {}]
  %s1 = inlined_call_operand.hbm [shape: f32[32,96], index: 1, kind: input, shape index: {}]
  %s2 = inlined_call_operand.vmem [shape: f32[1,96], index: 2, kind: input, shape index: {}]
  %s3 = inlined_call_operand.hbm [shape: f32[32,32], index: 3, kind: input, shape index: {}]
  %s4 = inlined_call_operand.vmem [shape: f32[1,32], index: 4, kind: input, shape index: {}]
  %s5 = inlined_call_operand.hbm [shape: f32[2,8,32], index: 5, kind: output, shape index: {}]
  %s6 = sld [smem:[#allocation0]]
  $region65: #{tpu_custom_call.1} parent=0
    _
  %s8 = ssub.s32 1, %s6
  %s9 = scalar_select 0, %s8, %s6
  $region1: #{tpu_custom_call.1} parent=0
    #allocation2 [shape = 'u8[8192]{0}', space=vmem, size = 0x2000, scoped, tag = 'input window, operand 0']
    #allocation3 [shape = 's32[2]{0}', space=sflag, size = 0x8, scoped, tag = 'scoped memory for tpu_custom_call.1']
    #allocation4 [shape = 's32[2]{0}', space=sflag, size = 0x8, scoped, tag = 'scoped memory for tpu_custom_call.1']
    #allocation5 [shape = 'u8[16384]{0}', space=vmem, size = 0x4000, scoped, tag = 'input window, operand 1, single buffered']
    #allocation6 [shape = 's32[1]{0}', space=sflag, size = 0x4, scoped, tag = 'scoped memory for tpu_custom_call.1']
    #allocation7 [shape = 'u8[16384]{0}', space=vmem, size = 0x4000, scoped, tag = 'input window, operand 3, single buffered']
    #allocation8 [shape = 'u8[8192]{0}', space=vmem, size = 0x2000, scoped, tag = 'output window, operand 0']
    %10 = vsyncpa [#allocation3], 0
    %s11 = scalar_lea.sflag [#allocation3], 1
    %12 = vsyncpa %s11, 0
    %13 = vsyncpa [#allocation6], 0
    %14 = vsyncpa [#allocation4], 0
    %s15 = scalar_lea.sflag [#allocation4], 1
    %16 = vsyncpa %s15, 0
    loop: start=0, step=1, limit=4
    $region2: #{tpu_custom_call.1} parent=1 // loop_pre_header
      _
    $region3: #{tpu_custom_call.1} parent=1 // loop_header
      %s18 = sphi 0, %s22
      %p19 = scmp.ge.s32.totalorder %s18, 4
      %s28 = sphi 0, %s30
      %s31 = sphi 0, %s28
      %s32 = sphi 0, %s31
      %s48 = sphi 0, %s32
      %s52 = sphi 0, %s52
      %s54 = sphi 0, %s52
      %s55 = sphi 0, %s54
      %s69 = sphi 0, %s55
      %s73 = sphi 0, %s73
      %s75 = sphi 0, %s73
      %s76 = sphi 0, %s75
      %s90 = sphi 0, %s76
      %s94 = sphi 0, %s94
      %s96 = sphi 0, %s94
      %s97 = sphi 0, %s96
      %s111 = sphi 0, %s97
      %s115 = sphi 0, %s115
      %s117 = sphi 0, %s115
      %s118 = sphi 0, %s117
      %s132 = sphi 0, %s118
      %s138 = sphi 0, %s140
      %s141 = sphi 0, %s138
      %s142 = sphi 0, %s141
      %s158 = sphi 0, %s142
    $region4: #{tpu_custom_call.1} parent=1 // loop_header_branch
      %21 = sbr.rel (%p19) target = $region8
    $region5: #{tpu_custom_call.1} parent=1 // loop_body
      %s23 = ssub.s32 %s18, 1
      %s24 = ssub.s32 %s18, 2
      %s25 = sadd.s32 %s18, 1
      %s26 = ssub.s32 %s18, %s25
      %p27 = scmp.eq.s32.totalorder %s26, 0
      %s29 = sadd.s32 %s28, 1
      %s30 = scalar_select %p27, %s28, %s29
      %p33 = pneg %p27
      %p34 = scmp.eq.s32.totalorder %s18, 1
      %p35 = por %p33, %p34
      %p36 = scmp.ne.s32.totalorder %s28, %s31
      %p37 = scmp.eq.s32.totalorder %s18, 0
      %p38 = por %p36, %p37
      %p39 = scmp.ne.s32.totalorder %s28, %s31
      %p40 = scmp.eq.s32.totalorder %s23, 1
      %p41 = por %p39, %p40
      %p42 = scmp.ne.s32.totalorder %s31, %s32
      %p43 = scmp.eq.s32.totalorder %s23, 0
      %p44 = por %p42, %p43
      %p45 = scmp.ne.s32.totalorder %s31, %s32
      %p46 = scmp.eq.s32.totalorder %s24, 1
      %p47 = por %p45, %p46
      %p49 = scmp.ne.s32.totalorder %s32, %s48
      %p50 = scmp.eq.s32.totalorder %s24, 0
      %p51 = por %p49, %p50
      %s53 = sadd.s32 %s52, 1
      %p56 = scmp.eq.s32.totalorder %s18, 1
      %p57 = scmp.ne.s32.totalorder %s52, %s54
      %p58 = scmp.eq.s32.totalorder %s18, 0
      %p59 = por %p57, %p58
      %p60 = scmp.ne.s32.totalorder %s52, %s54
      %p61 = scmp.eq.s32.totalorder %s23, 1
      %p62 = por %p60, %p61
      %p63 = scmp.ne.s32.totalorder %s54, %s55
      %p64 = scmp.eq.s32.totalorder %s23, 0
      %p65 = por %p63, %p64
      %p66 = scmp.ne.s32.totalorder %s54, %s55
      %p67 = scmp.eq.s32.totalorder %s24, 1
      %p68 = por %p66, %p67
      %p70 = scmp.ne.s32.totalorder %s55, %s69
      %p71 = scmp.eq.s32.totalorder %s24, 0
      %p72 = por %p70, %p71
      %s74 = sadd.s32 %s73, 1
      %p77 = scmp.eq.s32.totalorder %s18, 1
      %p78 = scmp.ne.s32.totalorder %s73, %s75
      %p79 = scmp.eq.s32.totalorder %s18, 0
      %p80 = por %p78, %p79
      %p81 = scmp.ne.s32.totalorder %s73, %s75
      %p82 = scmp.eq.s32.totalorder %s23, 1
      %p83 = por %p81, %p82
      %p84 = scmp.ne.s32.totalorder %s75, %s76
      %p85 = scmp.eq.s32.totalorder %s23, 0
      %p86 = por %p84, %p85
      %p87 = scmp.ne.s32.totalorder %s75, %s76
      %p88 = scmp.eq.s32.totalorder %s24, 1
      %p89 = por %p87, %p88
      %p91 = scmp.ne.s32.totalorder %s76, %s90
      %p92 = scmp.eq.s32.totalorder %s24, 0
      %p93 = por %p91, %p92
      %s95 = sadd.s32 %s94, 1
      %p98 = scmp.eq.s32.totalorder %s18, 1
      %p99 = scmp.ne.s32.totalorder %s94, %s96
      %p100 = scmp.eq.s32.totalorder %s18, 0
      %p101 = por %p99, %p100
      %p102 = scmp.ne.s32.totalorder %s94, %s96
      %p103 = scmp.eq.s32.totalorder %s23, 1
      %p104 = por %p102, %p103
      %p105 = scmp.ne.s32.totalorder %s96, %s97
      %p106 = scmp.eq.s32.totalorder %s23, 0
      %p107 = por %p105, %p106
      %p108 = scmp.ne.s32.totalorder %s96, %s97
      %p109 = scmp.eq.s32.totalorder %s24, 1
      %p110 = por %p108, %p109
      %p112 = scmp.ne.s32.totalorder %s97, %s111
      %p113 = scmp.eq.s32.totalorder %s24, 0
      %p114 = por %p112, %p113
      %s116 = sadd.s32 %s115, 1
      %p119 = scmp.eq.s32.totalorder %s18, 1
      %p120 = scmp.ne.s32.totalorder %s115, %s117
      %p121 = scmp.eq.s32.totalorder %s18, 0
      %p122 = por %p120, %p121
      %p123 = scmp.ne.s32.totalorder %s115, %s117
      %p124 = scmp.eq.s32.totalorder %s23, 1
      %p125 = por %p123, %p124
      %p126 = scmp.ne.s32.totalorder %s117, %s118
      %p127 = scmp.eq.s32.totalorder %s23, 0
      %p128 = por %p126, %p127
      %p129 = scmp.ne.s32.totalorder %s117, %s118
      %p130 = scmp.eq.s32.totalorder %s24, 1
      %p131 = por %p129, %p130
      %p133 = scmp.ne.s32.totalorder %s118, %s132
      %p134 = scmp.eq.s32.totalorder %s24, 0
      %p135 = por %p133, %p134
      %s136 = ssub.s32 %s18, %s25
      %p137 = scmp.eq.s32.totalorder %s136, 0
      %s139 = sadd.s32 %s138, 1
      %s140 = scalar_select %p137, %s138, %s139
      %p143 = pneg %p137
      %p144 = scmp.eq.s32.totalorder %s18, 1
      %p145 = por %p143, %p144
      %p146 = scmp.ne.s32.totalorder %s138, %s141
      %p147 = scmp.eq.s32.totalorder %s18, 0
      %p148 = por %p146, %p147
      %p149 = scmp.ne.s32.totalorder %s138, %s141
      %p150 = scmp.eq.s32.totalorder %s23, 1
      %p151 = por %p149, %p150
      %p152 = scmp.ne.s32.totalorder %s141, %s142
      %p153 = scmp.eq.s32.totalorder %s23, 0
      %p154 = por %p152, %p153
      %p155 = scmp.ne.s32.totalorder %s141, %s142
      %p156 = scmp.eq.s32.totalorder %s24, 1
      %p157 = por %p155, %p156
      %p159 = scmp.ne.s32.totalorder %s142, %s158
      %p160 = scmp.eq.s32.totalorder %s24, 0
      %p161 = por %p159, %p160
      %p162 = scmp.le.s32.totalorder 1, %s18
      %p163 = scmp.lt.s32.totalorder %s18, 3
      %p164 = pnand %p162, %p163
      %p165 = pneg %p164
      // Predicated region
      $region9: #{tpu_custom_call.1} parent=5 // pred_check
        _
      $region10: #{tpu_custom_call.1} parent=5 // pred_check_branch
        %167 = sbr.rel (%p164) target = $region12
      $region11: #{tpu_custom_call.1} parent=5 // pred_region
        %s168 = ssub.s32 %s18, 1
        // Predicated region
        $region13: #{tpu_custom_call.1} parent=11 // pred_check
          %p169 = pneg %p65
        $region14: #{tpu_custom_call.1} parent=11 // pred_check_branch
          %171 = sbr.rel (%p169) target = $region16
        $region15: #{tpu_custom_call.1} parent=11 // pred_region
          %s173 = ssub.s32 512, 512
          %174 = vsyncadd [#allocation6], %s173
          %s175 = sshll.u32 [#allocation5], 4
          %s176 = int_to_ptr.vmem [resolvable:$true] %s175
          %181 = dma.hbm_to_vmem [thread:$0]  %s1, 512, %s176, [#allocation6], 128, 128, 8
        $region16: #{tpu_custom_call.1} parent=11 // pred_fallthru
          _
        // Predicated region
        $region17: #{tpu_custom_call.1} parent=11 // pred_check
          %p182 = pneg %p86
        $region18: #{tpu_custom_call.1} parent=11 // pred_check_branch
          %184 = sbr.rel (%p182) target = $region20
        $region19: #{tpu_custom_call.1} parent=11 // pred_region
          _
        $region20: #{tpu_custom_call.1} parent=11 // pred_fallthru
          _
        // Predicated region
        $region21: #{tpu_custom_call.1} parent=11 // pred_check
          %p185 = pneg %p107
        $region22: #{tpu_custom_call.1} parent=11 // pred_check_branch
          %187 = sbr.rel (%p185) target = $region24
        $region23: #{tpu_custom_call.1} parent=11 // pred_region
          %s189 = ssub.s32 512, 512
          %190 = vsyncadd [#allocation6], %s189
          %s191 = sshll.u32 [#allocation7], 4
          %s192 = int_to_ptr.vmem [resolvable:$true] %s191
          %197 = dma.hbm_to_vmem [thread:$0]  %s3, 512, %s192, [#allocation6], 128, 128, 8
        $region24: #{tpu_custom_call.1} parent=11 // pred_fallthru
          _
        // Predicated region
        $region25: #{tpu_custom_call.1} parent=11 // pred_check
          %p198 = pneg %p128
        $region26: #{tpu_custom_call.1} parent=11 // pred_check_branch
          %200 = sbr.rel (%p198) target = $region28
        $region27: #{tpu_custom_call.1} parent=11 // pred_region
          _
        $region28: #{tpu_custom_call.1} parent=11 // pred_fallthru
          _
      $region12: #{tpu_custom_call.1} parent=5 // pred_fallthru
        _
      %p201 = scmp.lt.s32.totalorder %s18, 2
      // Predicated region
      $region29: #{tpu_custom_call.1} parent=5 // pred_check
        %p202 = pneg %p201
      $region30: #{tpu_custom_call.1} parent=5 // pred_check_branch
        %204 = sbr.rel (%p202) target = $region32
      $region31: #{tpu_custom_call.1} parent=5 // pred_region
        // Predicated region
        $region33: #{tpu_custom_call.1} parent=31 // pred_check
          %p205 = pneg %p38
        $region34: #{tpu_custom_call.1} parent=31 // pred_check_branch
          %207 = sbr.rel (%p205) target = $region36
        $region35: #{tpu_custom_call.1} parent=31 // pred_region
          %s208 = sand.u32 %s28, 1
          %s209 = scalar_lea.sflag [#allocation3], %s208
          %s210 = sand.u32 %s28, 1
          %s211 = smul.addr %s210, 8
          %s212 = scalar_lea.vmem [#allocation2], %s211
          %s214 = ssub.s32 128, 128
          %215 = vsyncadd %s209, %s214
          %s216 = smul.addr %s18, 128
          %s217 = scalar_lea.hbm %s0, %s216
          %s219 = sshll.u32 %s212, 4
          %s220 = int_to_ptr.vmem [resolvable:$true] %s219
          %222 = dma.hbm_to_vmem [thread:$0]  %s217, 128, %s220, %s209
        $region36: #{tpu_custom_call.1} parent=31 // pred_fallthru
          _
      $region32: #{tpu_custom_call.1} parent=5 // pred_fallthru
        _
      %p223 = scmp.le.s32.totalorder 1, %s18
      %p224 = scmp.lt.s32.totalorder %s18, 3
      %p225 = pnand %p223, %p224
      %p226 = pneg %p225
      // Predicated region
      $region37: #{tpu_custom_call.1} parent=5 // pred_check
        _
      $region38: #{tpu_custom_call.1} parent=5 // pred_check_branch
        %228 = sbr.rel (%p225) target = $region40
      $region39: #{tpu_custom_call.1} parent=5 // pred_region
        %s229 = ssub.s32 %s18, 1
        %s230 = sand.u32 %s31, 1
        %s231 = scalar_lea.sflag [#allocation3], %s230
        %s232 = sand.u32 %s31, 1
        %s233 = smul.addr %s232, 8
        %s234 = scalar_lea.vmem [#allocation2], %s233
        // Predicated region
        $region41: #{tpu_custom_call.1} parent=39 // pred_check
          %p235 = pneg %p44
        $region42: #{tpu_custom_call.1} parent=39 // pred_check_branch
          %237 = sbr.rel (%p235) target = $region44
        $region43: #{tpu_custom_call.1} parent=39 // pred_region
          %238 = dma.done %s231, 128
        $region44: #{tpu_custom_call.1} parent=39 // pred_fallthru
          _
        // Predicated region
        $region45: #{tpu_custom_call.1} parent=39 // pred_check
          %p239 = pneg %p65
        $region46: #{tpu_custom_call.1} parent=39 // pred_check_branch
          %241 = sbr.rel (%p239) target = $region48
        $region47: #{tpu_custom_call.1} parent=39 // pred_region
          %242 = dma.done [#allocation6], 512
        $region48: #{tpu_custom_call.1} parent=39 // pred_fallthru
          _
        // Predicated region
        $region49: #{tpu_custom_call.1} parent=39 // pred_check
          %p243 = pneg %p107
        $region50: #{tpu_custom_call.1} parent=39 // pred_check_branch
          %245 = sbr.rel (%p243) target = $region52
        $region51: #{tpu_custom_call.1} parent=39 // pred_region
          %246 = dma.done [#allocation6], 512
        $region52: #{tpu_custom_call.1} parent=39 // pred_fallthru
          _
        %s247 = sand.u32 %s31, 1
        %s248 = scalar_lea.sflag [#allocation3], %s247
        %s249 = sand.u32 %s31, 1
        %s250 = smul.addr %s249, 8
        %s251 = scalar_lea.vmem [#allocation2], %s250
        %p252 = pneg %p44
        %p253 = pneg %p41
        %p254 = pneg %p65
        %p255 = pneg %p62
        %p256 = pneg %p86
        %p257 = pneg %p83
        %p258 = pneg %p107
        %p259 = pneg %p104
        %p260 = pneg %p128
        %p261 = pneg %p125
        %p262 = pneg %p154
        %p263 = pneg %p151
        %s264 = sand.u32 %s141, 1
        %s265 = scalar_lea.sflag [#allocation4], %s264
        %s266 = sand.u32 %s141, 1
        %s267 = smul.addr %s266, 8
        %s268 = scalar_lea.vmem [#allocation8], %s267
        %v269 = vld [vmem:[%s234] sm:$0xff]
        %v270 = vld [vmem:[#allocation5] sm:$0xff]
        %v271 = vld [vmem:[#allocation5 + $0x8] sm:$0xff]
        %v272 = vld [vmem:[#allocation5 + $0x10] sm:$0xff]
        %v273 = vld [vmem:[#allocation5 + $0x18] sm:$0xff]
        %v274 = vld [vmem:[#allocation7] sm:$0xff]
        %v275 = vld [vmem:[#allocation7 + $0x8] sm:$0xff]
        %v276 = vld [vmem:[#allocation7 + $0x10] sm:$0xff]
        %v277 = vld [vmem:[#allocation7 + $0x18] sm:$0xff]
        %v278 = vld [vmem:[%s2] sm:$0x1]
        %v280 = vlaneseq
        %v281 = vshrl.u32 %v280, 7
        %v282 = vsub.s32 0, %v281
        %v283 = vrot.slane %v278, %v282
        %vm285 = vcmask 261120
        %v287 = vsel %vm285, %v269, 0
        %289 = vmatprep.subr.mxu0 0.0
        %290 = vmatpush1.msra.mxu0 %v270
        %291 = vmatprep.subr.mxu0 0.0
        %292 = vmatpush1.msra.mxu0 %v271
        %293 = vmatprep.subr.mxu0 0.0
        %294 = vmatpush1.msra.mxu0 %v272
        %295 = vmatprep.subr.mxu0 0.0
        %296 = vmatpush1.msra.mxu0 %v273
        %297 = vmatprep.subr.mxu0 0.0
        %298 = vmatpush1.msra.mxu0 0.0
        %299 = vmatprep.subr.mxu0 0.0
        %300 = vmatpush1.msra.mxu0 0.0
        %301 = vmatprep.subr.mxu0 0.0
        %302 = vmatpush1.msra.mxu0 0.0
        %303 = vmatprep.subr.mxu0 0.0
        %304 = vmatpush1.msra.mxu0 0.0
        %305 = vmatprep.subr.mxu0 0.0
        %306 = vmatpush1.msra.mxu0 0.0
        %307 = vmatprep.subr.mxu0 0.0
        %308 = vmatpush1.msra.mxu0 0.0
        %309 = vmatprep.subr.mxu0 0.0
        %310 = vmatpush1.msra.mxu0 0.0
        %311 = vmatprep.subr.mxu0 0.0
        %312 = vmatpush1.msra.mxu0 0.0
        %313 = vmatprep.subr.mxu0 0.0
        %314 = vmatpush1.msra.mxu0 0.0
        %315 = vmatprep.subr.mxu0 0.0
        %316 = vmatpush1.msra.mxu0 0.0
        %317 = vmatprep.subr.mxu0 0.0
        %318 = vmatpush1.msra.mxu0 0.0
        %319 = vmatprep.subr.mxu0 0.0
        %320 = vmatpush1.msra.mxu0 0.0
        %321 = vmatprep.subr.mxu0 0.0
        %322 = vmatpush1.msra.mxu0 0.0
        %323 = vmatprep.subr.mxu0 0.0
        %324 = vmatpush1.msra.mxu0 0.0
        %325 = vmatprep.subr.mxu0 0.0
        %326 = vmatpush1.msra.mxu0 0.0
        %327 = vmatprep.subr.mxu0 0.0
        %328 = vmatpush1.msra.mxu0 0.0
        %329 = vmatprep.subr.mxu0 0.0
        %330 = vmatpush1.msra.mxu0 0.0
        %331 = vmatprep.subr.mxu0 0.0
        %332 = vmatpush1.msra.mxu0 0.0
        %333 = vmatprep.subr.mxu0 0.0
        %334 = vmatpush1.msra.mxu0 0.0
        %335 = vmatprep.subr.mxu0 0.0
        %336 = vmatpush1.msra.mxu0 0.0
        %337 = vmatprep.subr.mxu0 0.0
        %338 = vmatpush1.msra.mxu0 0.0
        %339 = vmatprep.subr.mxu0 0.0
        %340 = vmatpush1.msra.mxu0 0.0
        %341 = vmatprep.subr.mxu0 0.0
        %342 = vmatpush1.msra.mxu0 0.0
        %343 = vmatprep.subr.mxu0 0.0
        %344 = vmatpush1.msra.mxu0 0.0
        %345 = vmatprep.subr.mxu0 0.0
        %346 = vmatpush1.msra.mxu0 0.0
        %347 = vmatprep.subr.mxu0 0.0
        %348 = vmatpush1.msra.mxu0 0.0
        %349 = vmatprep.subr.mxu0 0.0
        %350 = vmatpush1.msra.mxu0 0.0
        %351 = vmatprep.subr.mxu0 0.0
        %352 = vmatpush1.msra.mxu0 0.0
        %353 = vmatprep.mubr.f32.mxu0 0.0
        %354 = vmatmul.mubr.f32.gmra.mrb[0].mxu0 %v287
        %v355 = vpop.f32.mrb[0].mxu0
        %v356 = vadd.f32 %v283, %v355
        %v357 = vpop.f32.mrb[0].mxu0
        %358 = vdwg.mxu0
        %v359 = vlaneseq
        %v360 = vshrl.u32 %v359, 7
        %v361 = vlaneseq
        %v362 = vand.u32 %v361, 127
        %vm363 = vcmp.le.s32.totalorder %v362, %v360
        %365 = vrot.lane.b32.xlu0 %v356, 96
        %v366 = vpop.permute.xlu0 %365
        %vm367 = vcmask 64512
        %v368 = vsel %vm367, %v356, 0
        %v370 = vsel %vm367, %v366, 0
        %372 = vmatprep.subr.mxu0 0.0
        %373 = vmatpush1.xpose.msra.mxu0 %v370
        %374 = vmatprep.subr.mxu0 0.0
        %375 = vmatpush1.xpose.msra.mxu0 0.0
        %376 = vmatprep.subr.mxu0 0.0
        %377 = vmatpush1.xpose.msra.mxu0 0.0
        %378 = vmatprep.subr.mxu0 0.0
        %379 = vmatpush1.xpose.msra.mxu0 0.0
        %380 = vmatprep.subr.mxu0 0.0
        %381 = vmatpush1.xpose.msra.mxu0 0.0
        %382 = vmatprep.subr.mxu0 0.0
        %383 = vmatpush1.xpose.msra.mxu0 0.0
        %384 = vmatprep.subr.mxu0 0.0
        %385 = vmatpush1.xpose.msra.mxu0 0.0
        %386 = vmatprep.subr.mxu0 0.0
        %387 = vmatpush1.xpose.msra.mxu0 0.0
        %388 = vmatprep.subr.mxu0 0.0
        %389 = vmatpush1.xpose.msra.mxu0 0.0
        %390 = vmatprep.subr.mxu0 0.0
        %391 = vmatpush1.xpose.msra.mxu0 0.0
        %392 = vmatprep.subr.mxu0 0.0
        %393 = vmatpush1.xpose.msra.mxu0 0.0
        %394 = vmatprep.subr.mxu0 0.0
        %395 = vmatpush1.xpose.msra.mxu0 0.0
        %396 = vmatprep.subr.mxu0 0.0
        %397 = vmatpush1.xpose.msra.mxu0 0.0
        %398 = vmatprep.subr.mxu0 0.0
        %399 = vmatpush1.xpose.msra.mxu0 0.0
        %400 = vmatprep.subr.mxu0 0.0
        %401 = vmatpush1.xpose.msra.mxu0 0.0
        %402 = vmatprep.subr.mxu0 0.0
        %403 = vmatpush1.xpose.msra.mxu0 0.0
        %404 = vmatprep.subr.mxu0 0.0
        %405 = vmatpush1.xpose.msra.mxu0 0.0
        %406 = vmatprep.subr.mxu0 0.0
        %407 = vmatpush1.xpose.msra.mxu0 0.0
        %408 = vmatprep.subr.mxu0 0.0
        %409 = vmatpush1.xpose.msra.mxu0 0.0
        %410 = vmatprep.subr.mxu0 0.0
        %411 = vmatpush1.xpose.msra.mxu0 0.0
        %412 = vmatprep.subr.mxu0 0.0
        %413 = vmatpush1.xpose.msra.mxu0 0.0
        %414 = vmatprep.subr.mxu0 0.0
        %415 = vmatpush1.xpose.msra.mxu0 0.0
        %416 = vmatprep.subr.mxu0 0.0
        %417 = vmatpush1.xpose.msra.mxu0 0.0
        %418 = vmatprep.subr.mxu0 0.0
        %419 = vmatpush1.xpose.msra.mxu0 0.0
        %420 = vmatprep.subr.mxu0 0.0
        %421 = vmatpush1.xpose.msra.mxu0 0.0
        %422 = vmatprep.subr.mxu0 0.0
        %423 = vmatpush1.xpose.msra.mxu0 0.0
        %424 = vmatprep.subr.mxu0 0.0
        %425 = vmatpush1.xpose.msra.mxu0 0.0
        %426 = vmatprep.subr.mxu0 0.0
        %427 = vmatpush1.xpose.msra.mxu0 0.0
        %428 = vmatprep.subr.mxu0 0.0
        %429 = vmatpush1.xpose.msra.mxu0 0.0
        %430 = vmatprep.subr.mxu0 0.0
        %431 = vmatpush1.xpose.msra.mxu0 0.0
        %432 = vmatprep.subr.mxu0 0.0
        %433 = vmatpush1.xpose.msra.mxu0 0.0
        %434 = vmatprep.subr.mxu0 0.0
        %435 = vmatpush1.xpose.msra.mxu0 0.0
        %436 = vmatprep.mubr.f32.mxu0 0.0
        %437 = vmatmul.mubr.f32.gmra.mrb[0].mxu0 %v368
        %v438 = vpop.f32.mrb[0].mxu0
        %v439 = vadd.f32 0.0, %v438
        %v440 = vpop.f32.mrb[0].mxu0
        %441 = vdwg.mxu0
        %v442 = vmul.f32 %v439, 0.35355338
        %v443 = vsel %vm363, %v442, -1e+30
        %v444 = vsel %vm367, %v443, -inf
        %445 = vmax.xlane.f32.xlu0 %v444
        %v446 = vpop.xlane.xlu0 %445
        %v447 = vsub.f32 %v443, %v446
        %v448 = vmul.f32 %v447, 1.442695
        %v449 = vpow.pop %v448
        %v450 = vsel %vm367, %v449, 0.0
        %451 = vadd.xlane.f32.xlu0 %v450
        %v452 = vpop.xlane.xlu0 %451
        %v453 = vrcp.pop %v452
        %v454 = vmul.f32 %v452, %v453
        %v455 = vsub.f32 2.0, %v454
        %v456 = vmul.f32 %v453, %v455
        %v457 = vmul.f32 %v449, %v456
        %458 = vrot.lane.b32.xlu0 %v356, 64
        %v459 = vpop.permute.xlu0 %458
        %v462 = vsel %vm367, %v457, 0
        %464 = vmatprep.subr.mxu0 0.0
        %465 = vmatpush1.msra.mxu0 %v459
        %466 = vmatprep.subr.mxu0 0.0
        %467 = vmatpush1.msra.mxu0 0.0
        %468 = vmatprep.subr.mxu0 0.0
        %469 = vmatpush1.msra.mxu0 0.0
        %470 = vmatprep.subr.mxu0 0.0
        %471 = vmatpush1.msra.mxu0 0.0
        %472 = vmatprep.subr.mxu0 0.0
        %473 = vmatpush1.msra.mxu0 0.0
        %474 = vmatprep.subr.mxu0 0.0
        %475 = vmatpush1.msra.mxu0 0.0
        %476 = vmatprep.subr.mxu0 0.0
        %477 = vmatpush1.msra.mxu0 0.0
        %478 = vmatprep.subr.mxu0 0.0
        %479 = vmatpush1.msra.mxu0 0.0
        %480 = vmatprep.subr.mxu0 0.0
        %481 = vmatpush1.msra.mxu0 0.0
        %482 = vmatprep.subr.mxu0 0.0
        %483 = vmatpush1.msra.mxu0 0.0
        %484 = vmatprep.subr.mxu0 0.0
        %485 = vmatpush1.msra.mxu0 0.0
        %486 = vmatprep.subr.mxu0 0.0
        %487 = vmatpush1.msra.mxu0 0.0
        %488 = vmatprep.subr.mxu0 0.0
        %489 = vmatpush1.msra.mxu0 0.0
        %490 = vmatprep.subr.mxu0 0.0
        %491 = vmatpush1.msra.mxu0 0.0
        %492 = vmatprep.subr.mxu0 0.0
        %493 = vmatpush1.msra.mxu0 0.0
        %494 = vmatprep.subr.mxu0 0.0
        %495 = vmatpush1.msra.mxu0 0.0
        %496 = vmatprep.subr.mxu0 0.0
        %497 = vmatpush1.msra.mxu0 0.0
        %498 = vmatprep.subr.mxu0 0.0
        %499 = vmatpush1.msra.mxu0 0.0
        %500 = vmatprep.subr.mxu0 0.0
        %501 = vmatpush1.msra.mxu0 0.0
        %502 = vmatprep.subr.mxu0 0.0
        %503 = vmatpush1.msra.mxu0 0.0
        %504 = vmatprep.subr.mxu0 0.0
        %505 = vmatpush1.msra.mxu0 0.0
        %506 = vmatprep.subr.mxu0 0.0
        %507 = vmatpush1.msra.mxu0 0.0
        %508 = vmatprep.subr.mxu0 0.0
        %509 = vmatpush1.msra.mxu0 0.0
        %510 = vmatprep.subr.mxu0 0.0
        %511 = vmatpush1.msra.mxu0 0.0
        %512 = vmatprep.subr.mxu0 0.0
        %513 = vmatpush1.msra.mxu0 0.0
        %514 = vmatprep.subr.mxu0 0.0
        %515 = vmatpush1.msra.mxu0 0.0
        %516 = vmatprep.subr.mxu0 0.0
        %517 = vmatpush1.msra.mxu0 0.0
        %518 = vmatprep.subr.mxu0 0.0
        %519 = vmatpush1.msra.mxu0 0.0
        %520 = vmatprep.subr.mxu0 0.0
        %521 = vmatpush1.msra.mxu0 0.0
        %522 = vmatprep.subr.mxu0 0.0
        %523 = vmatpush1.msra.mxu0 0.0
        %524 = vmatprep.subr.mxu0 0.0
        %525 = vmatpush1.msra.mxu0 0.0
        %526 = vmatprep.subr.mxu0 0.0
        %527 = vmatpush1.msra.mxu0 0.0
        %528 = vmatprep.mubr.f32.mxu0 0.0
        %529 = vmatmul.mubr.f32.gmra.mrb[0].mxu0 %v462
        %v530 = vpop.f32.mrb[0].mxu0
        %v531 = vadd.f32 0.0, %v530
        %v532 = vpop.f32.mrb[0].mxu0
        %533 = vdwg.mxu0
        %534 = vrot.lane.b32.xlu0 %v356, 120
        %v535 = vpop.permute.xlu0 %534
        %536 = vrot.lane.b32.xlu0 %v356, 88
        %v537 = vpop.permute.xlu0 %536
        %v538 = vsel %vm367, %v535, 0
        %v540 = vsel %vm367, %v537, 0
        %542 = vmatprep.subr.mxu0 0.0
        %543 = vmatpush1.xpose.msra.mxu0 %v540
        %544 = vmatprep.subr.mxu0 0.0
        %545 = vmatpush1.xpose.msra.mxu0 0.0
        %546 = vmatprep.subr.mxu0 0.0
        %547 = vmatpush1.xpose.msra.mxu0 0.0
        %548 = vmatprep.subr.mxu0 0.0
        %549 = vmatpush1.xpose.msra.mxu0 0.0
        %550 = vmatprep.subr.mxu0 0.0
        %551 = vmatpush1.xpose.msra.mxu0 0.0
        %552 = vmatprep.subr.mxu0 0.0
        %553 = vmatpush1.xpose.msra.mxu0 0.0
        %554 = vmatprep.subr.mxu0 0.0
        %555 = vmatpush1.xpose.msra.mxu0 0.0
        %556 = vmatprep.subr.mxu0 0.0
        %557 = vmatpush1.xpose.msra.mxu0 0.0
        %558 = vmatprep.subr.mxu0 0.0
        %559 = vmatpush1.xpose.msra.mxu0 0.0
        %560 = vmatprep.subr.mxu0 0.0
        %561 = vmatpush1.xpose.msra.mxu0 0.0
        %562 = vmatprep.subr.mxu0 0.0
        %563 = vmatpush1.xpose.msra.mxu0 0.0
        %564 = vmatprep.subr.mxu0 0.0
        %565 = vmatpush1.xpose.msra.mxu0 0.0
        %566 = vmatprep.subr.mxu0 0.0
        %567 = vmatpush1.xpose.msra.mxu0 0.0
        %568 = vmatprep.subr.mxu0 0.0
        %569 = vmatpush1.xpose.msra.mxu0 0.0
        %570 = vmatprep.subr.mxu0 0.0
        %571 = vmatpush1.xpose.msra.mxu0 0.0
        %572 = vmatprep.subr.mxu0 0.0
        %573 = vmatpush1.xpose.msra.mxu0 0.0
        %574 = vmatprep.subr.mxu0 0.0
        %575 = vmatpush1.xpose.msra.mxu0 0.0
        %576 = vmatprep.subr.mxu0 0.0
        %577 = vmatpush1.xpose.msra.mxu0 0.0
        %578 = vmatprep.subr.mxu0 0.0
        %579 = vmatpush1.xpose.msra.mxu0 0.0
        %580 = vmatprep.subr.mxu0 0.0
        %581 = vmatpush1.xpose.msra.mxu0 0.0
        %582 = vmatprep.subr.mxu0 0.0
        %583 = vmatpush1.xpose.msra.mxu0 0.0
        %584 = vmatprep.subr.mxu0 0.0
        %585 = vmatpush1.xpose.msra.mxu0 0.0
        %586 = vmatprep.subr.mxu0 0.0
        %587 = vmatpush1.xpose.msra.mxu0 0.0
        %588 = vmatprep.subr.mxu0 0.0
        %589 = vmatpush1.xpose.msra.mxu0 0.0
        %590 = vmatprep.subr.mxu0 0.0
        %591 = vmatpush1.xpose.msra.mxu0 0.0
        %592 = vmatprep.subr.mxu0 0.0
        %593 = vmatpush1.xpose.msra.mxu0 0.0
        %594 = vmatprep.subr.mxu0 0.0
        %595 = vmatpush1.xpose.msra.mxu0 0.0
        %596 = vmatprep.subr.mxu0 0.0
        %597 = vmatpush1.xpose.msra.mxu0 0.0
        %598 = vmatprep.subr.mxu0 0.0
        %599 = vmatpush1.xpose.msra.mxu0 0.0
        %600 = vmatprep.subr.mxu0 0.0
        %601 = vmatpush1.xpose.msra.mxu0 0.0
        %602 = vmatprep.subr.mxu0 0.0
        %603 = vmatpush1.xpose.msra.mxu0 0.0
        %604 = vmatprep.subr.mxu0 0.0
        %605 = vmatpush1.xpose.msra.mxu0 0.0
        %606 = vmatprep.mubr.f32.mxu0 0.0
        %607 = vmatmul.mubr.f32.gmra.mrb[0].mxu0 %v538
        %v608 = vpop.f32.mrb[0].mxu0
        %v609 = vadd.f32 0.0, %v608
        %v610 = vpop.f32.mrb[0].mxu0
        %611 = vdwg.mxu0
        %v612 = vmul.f32 %v609, 0.35355338
        %v613 = vsel %vm363, %v612, -1e+30
        %v614 = vsel %vm367, %v613, -inf
        %615 = vmax.xlane.f32.xlu0 %v614
        %v616 = vpop.xlane.xlu0 %615
        %v617 = vsub.f32 %v613, %v616
        %v618 = vmul.f32 %v617, 1.442695
        %v619 = vpow.pop %v618
        %v620 = vsel %vm367, %v619, 0.0
        %621 = vadd.xlane.f32.xlu0 %v620
        %v622 = vpop.xlane.xlu0 %621
        %v623 = vrcp.pop %v622
        %v624 = vmul.f32 %v622, %v623
        %v625 = vsub.f32 2.0, %v624
        %v626 = vmul.f32 %v623, %v625
        %v627 = vmul.f32 %v619, %v626
        %628 = vrot.lane.b32.xlu0 %v356, 56
        %v629 = vpop.permute.xlu0 %628
        %v632 = vsel %vm367, %v627, 0
        %634 = vmatprep.subr.mxu0 0.0
        %635 = vmatpush1.msra.mxu0 %v629
        %636 = vmatprep.subr.mxu0 0.0
        %637 = vmatpush1.msra.mxu0 0.0
        %638 = vmatprep.subr.mxu0 0.0
        %639 = vmatpush1.msra.mxu0 0.0
        %640 = vmatprep.subr.mxu0 0.0
        %641 = vmatpush1.msra.mxu0 0.0
        %642 = vmatprep.subr.mxu0 0.0
        %643 = vmatpush1.msra.mxu0 0.0
        %644 = vmatprep.subr.mxu0 0.0
        %645 = vmatpush1.msra.mxu0 0.0
        %646 = vmatprep.subr.mxu0 0.0
        %647 = vmatpush1.msra.mxu0 0.0
        %648 = vmatprep.subr.mxu0 0.0
        %649 = vmatpush1.msra.mxu0 0.0
        %650 = vmatprep.subr.mxu0 0.0
        %651 = vmatpush1.msra.mxu0 0.0
        %652 = vmatprep.subr.mxu0 0.0
        %653 = vmatpush1.msra.mxu0 0.0
        %654 = vmatprep.subr.mxu0 0.0
        %655 = vmatpush1.msra.mxu0 0.0
        %656 = vmatprep.subr.mxu0 0.0
        %657 = vmatpush1.msra.mxu0 0.0
        %658 = vmatprep.subr.mxu0 0.0
        %659 = vmatpush1.msra.mxu0 0.0
        %660 = vmatprep.subr.mxu0 0.0
        %661 = vmatpush1.msra.mxu0 0.0
        %662 = vmatprep.subr.mxu0 0.0
        %663 = vmatpush1.msra.mxu0 0.0
        %664 = vmatprep.subr.mxu0 0.0
        %665 = vmatpush1.msra.mxu0 0.0
        %666 = vmatprep.subr.mxu0 0.0
        %667 = vmatpush1.msra.mxu0 0.0
        %668 = vmatprep.subr.mxu0 0.0
        %669 = vmatpush1.msra.mxu0 0.0
        %670 = vmatprep.subr.mxu0 0.0
        %671 = vmatpush1.msra.mxu0 0.0
        %672 = vmatprep.subr.mxu0 0.0
        %673 = vmatpush1.msra.mxu0 0.0
        %674 = vmatprep.subr.mxu0 0.0
        %675 = vmatpush1.msra.mxu0 0.0
        %676 = vmatprep.subr.mxu0 0.0
        %677 = vmatpush1.msra.mxu0 0.0
        %678 = vmatprep.subr.mxu0 0.0
        %679 = vmatpush1.msra.mxu0 0.0
        %680 = vmatprep.subr.mxu0 0.0
        %681 = vmatpush1.msra.mxu0 0.0
        %682 = vmatprep.subr.mxu0 0.0
        %683 = vmatpush1.msra.mxu0 0.0
        %684 = vmatprep.subr.mxu0 0.0
        %685 = vmatpush1.msra.mxu0 0.0
        %686 = vmatprep.subr.mxu0 0.0
        %687 = vmatpush1.msra.mxu0 0.0
        %688 = vmatprep.subr.mxu0 0.0
        %689 = vmatpush1.msra.mxu0 0.0
        %690 = vmatprep.subr.mxu0 0.0
        %691 = vmatpush1.msra.mxu0 0.0
        %692 = vmatprep.subr.mxu0 0.0
        %693 = vmatpush1.msra.mxu0 0.0
        %694 = vmatprep.subr.mxu0 0.0
        %695 = vmatpush1.msra.mxu0 0.0
        %696 = vmatprep.subr.mxu0 0.0
        %697 = vmatpush1.msra.mxu0 0.0
        %698 = vmatprep.mubr.f32.mxu0 0.0
        %699 = vmatmul.mubr.f32.gmra.mrb[0].mxu0 %v632
        %v700 = vpop.f32.mrb[0].mxu0
        %v701 = vadd.f32 0.0, %v700
        %v702 = vpop.f32.mrb[0].mxu0
        %703 = vdwg.mxu0
        %v705 = vsel %vm367, %v701, 0
        %707 = vmatprep.subr.mxu0 0.0
        %708 = vmatpush1.msra.mxu0 %v275
        %709 = vmatprep.subr.mxu0 0.0
        %710 = vmatpush1.msra.mxu0 0.0
        %711 = vmatprep.subr.mxu0 0.0
        %712 = vmatpush1.msra.mxu0 0.0
        %713 = vmatprep.subr.mxu0 0.0
        %714 = vmatpush1.msra.mxu0 0.0
        %715 = vmatprep.subr.mxu0 0.0
        %716 = vmatpush1.msra.mxu0 0.0
        %717 = vmatprep.subr.mxu0 0.0
        %718 = vmatpush1.msra.mxu0 0.0
        %719 = vmatprep.subr.mxu0 0.0
        %720 = vmatpush1.msra.mxu0 0.0
        %721 = vmatprep.subr.mxu0 0.0
        %722 = vmatpush1.msra.mxu0 0.0
        %723 = vmatprep.subr.mxu0 0.0
        %724 = vmatpush1.msra.mxu0 0.0
        %725 = vmatprep.subr.mxu0 0.0
        %726 = vmatpush1.msra.mxu0 0.0
        %727 = vmatprep.subr.mxu0 0.0
        %728 = vmatpush1.msra.mxu0 0.0
        %729 = vmatprep.subr.mxu0 0.0
        %730 = vmatpush1.msra.mxu0 0.0
        %731 = vmatprep.subr.mxu0 0.0
        %732 = vmatpush1.msra.mxu0 0.0
        %733 = vmatprep.subr.mxu0 0.0
        %734 = vmatpush1.msra.mxu0 0.0
        %735 = vmatprep.subr.mxu0 0.0
        %736 = vmatpush1.msra.mxu0 0.0
        %737 = vmatprep.subr.mxu0 0.0
        %738 = vmatpush1.msra.mxu0 0.0
        %739 = vmatprep.subr.mxu0 0.0
        %740 = vmatpush1.msra.mxu0 0.0
        %741 = vmatprep.subr.mxu0 0.0
        %742 = vmatpush1.msra.mxu0 0.0
        %743 = vmatprep.subr.mxu0 0.0
        %744 = vmatpush1.msra.mxu0 0.0
        %745 = vmatprep.subr.mxu0 0.0
        %746 = vmatpush1.msra.mxu0 0.0
        %747 = vmatprep.subr.mxu0 0.0
        %748 = vmatpush1.msra.mxu0 0.0
        %749 = vmatprep.subr.mxu0 0.0
        %750 = vmatpush1.msra.mxu0 0.0
        %751 = vmatprep.subr.mxu0 0.0
        %752 = vmatpush1.msra.mxu0 0.0
        %753 = vmatprep.subr.mxu0 0.0
        %754 = vmatpush1.msra.mxu0 0.0
        %755 = vmatprep.subr.mxu0 0.0
        %756 = vmatpush1.msra.mxu0 0.0
        %757 = vmatprep.subr.mxu0 0.0
        %758 = vmatpush1.msra.mxu0 0.0
        %759 = vmatprep.subr.mxu0 0.0
        %760 = vmatpush1.msra.mxu0 0.0
        %761 = vmatprep.subr.mxu0 0.0
        %762 = vmatpush1.msra.mxu0 0.0
        %763 = vmatprep.subr.mxu0 0.0
        %764 = vmatpush1.msra.mxu0 0.0
        %765 = vmatprep.subr.mxu0 0.0
        %766 = vmatpush1.msra.mxu0 0.0
        %767 = vmatprep.subr.mxu0 0.0
        %768 = vmatpush1.msra.mxu0 0.0
        %769 = vmatprep.subr.mxu0 0.0
        %770 = vmatpush1.msra.mxu0 0.0
        %771 = vmatprep.mubr.f32.mxu0 0.0
        %772 = vmatmul.mubr.f32.gmra.mrb[0].mxu0 %v705
        %v773 = vpop.f32.mrb[0].mxu0
        %v774 = vadd.f32 0.0, %v773
        %v775 = vpop.f32.mrb[0].mxu0
        %776 = vdwg.mxu0
        %v778 = vsel %vm367, %v531, 0
        %780 = vmatprep.subr.mxu0 0.0
        %781 = vmatpush1.msra.mxu0 %v274
        %782 = vmatprep.subr.mxu0 0.0
        %783 = vmatpush1.msra.mxu0 0.0
        %784 = vmatprep.subr.mxu0 0.0
        %785 = vmatpush1.msra.mxu0 0.0
        %786 = vmatprep.subr.mxu0 0.0
        %787 = vmatpush1.msra.mxu0 0.0
        %788 = vmatprep.subr.mxu0 0.0
        %789 = vmatpush1.msra.mxu0 0.0
        %790 = vmatprep.subr.mxu0 0.0
        %791 = vmatpush1.msra.mxu0 0.0
        %792 = vmatprep.subr.mxu0 0.0
        %793 = vmatpush1.msra.mxu0 0.0
        %794 = vmatprep.subr.mxu0 0.0
        %795 = vmatpush1.msra.mxu0 0.0
        %796 = vmatprep.subr.mxu0 0.0
        %797 = vmatpush1.msra.mxu0 0.0
        %798 = vmatprep.subr.mxu0 0.0
        %799 = vmatpush1.msra.mxu0 0.0
        %800 = vmatprep.subr.mxu0 0.0
        %801 = vmatpush1.msra.mxu0 0.0
        %802 = vmatprep.subr.mxu0 0.0
        %803 = vmatpush1.msra.mxu0 0.0
        %804 = vmatprep.subr.mxu0 0.0
        %805 = vmatpush1.msra.mxu0 0.0
        %806 = vmatprep.subr.mxu0 0.0
        %807 = vmatpush1.msra.mxu0 0.0
        %808 = vmatprep.subr.mxu0 0.0
        %809 = vmatpush1.msra.mxu0 0.0
        %810 = vmatprep.subr.mxu0 0.0
        %811 = vmatpush1.msra.mxu0 0.0
        %812 = vmatprep.subr.mxu0 0.0
        %813 = vmatpush1.msra.mxu0 0.0
        %814 = vmatprep.subr.mxu0 0.0
        %815 = vmatpush1.msra.mxu0 0.0
        %816 = vmatprep.subr.mxu0 0.0
        %817 = vmatpush1.msra.mxu0 0.0
        %818 = vmatprep.subr.mxu0 0.0
        %819 = vmatpush1.msra.mxu0 0.0
        %820 = vmatprep.subr.mxu0 0.0
        %821 = vmatpush1.msra.mxu0 0.0
        %822 = vmatprep.subr.mxu0 0.0
        %823 = vmatpush1.msra.mxu0 0.0
        %824 = vmatprep.subr.mxu0 0.0
        %825 = vmatpush1.msra.mxu0 0.0
        %826 = vmatprep.subr.mxu0 0.0
        %827 = vmatpush1.msra.mxu0 0.0
        %828 = vmatprep.subr.mxu0 0.0
        %829 = vmatpush1.msra.mxu0 0.0
        %830 = vmatprep.subr.mxu0 0.0
        %831 = vmatpush1.msra.mxu0 0.0
        %832 = vmatprep.subr.mxu0 0.0
        %833 = vmatpush1.msra.mxu0 0.0
        %834 = vmatprep.subr.mxu0 0.0
        %835 = vmatpush1.msra.mxu0 0.0
        %836 = vmatprep.subr.mxu0 0.0
        %837 = vmatpush1.msra.mxu0 0.0
        %838 = vmatprep.subr.mxu0 0.0
        %839 = vmatpush1.msra.mxu0 0.0
        %840 = vmatprep.subr.mxu0 0.0
        %841 = vmatpush1.msra.mxu0 0.0
        %842 = vmatprep.subr.mxu0 0.0
        %843 = vmatpush1.msra.mxu0 0.0
        %844 = vmatprep.mubr.f32.mxu0 0.0
        %845 = vmatmul.mubr.f32.gmra.mrb[0].mxu0 %v778
        %v846 = vpop.f32.mrb[0].mxu0
        %v847 = vadd.f32 %v774, %v846
        %v848 = vpop.f32.mrb[0].mxu0
        %849 = vdwg.mxu0
        %850 = vrot.lane.b32.xlu0 %v356, 112
        %v851 = vpop.permute.xlu0 %850
        %852 = vrot.lane.b32.xlu0 %v356, 80
        %v853 = vpop.permute.xlu0 %852
        %v854 = vsel %vm367, %v851, 0
        %v856 = vsel %vm367, %v853, 0
        %858 = vmatprep.subr.mxu0 0.0
        %859 = vmatpush1.xpose.msra.mxu0 %v856
        %860 = vmatprep.subr.mxu0 0.0
        %861 = vmatpush1.xpose.msra.mxu0 0.0
        %862 = vmatprep.subr.mxu0 0.0
        %863 = vmatpush1.xpose.msra.mxu0 0.0
        %864 = vmatprep.subr.mxu0 0.0
        %865 = vmatpush1.xpose.msra.mxu0 0.0
        %866 = vmatprep.subr.mxu0 0.0
        %867 = vmatpush1.xpose.msra.mxu0 0.0
        %868 = vmatprep.subr.mxu0 0.0
        %869 = vmatpush1.xpose.msra.mxu0 0.0
        %870 = vmatprep.subr.mxu0 0.0
        %871 = vmatpush1.xpose.msra.mxu0 0.0
        %872 = vmatprep.subr.mxu0 0.0
        %873 = vmatpush1.xpose.msra.mxu0 0.0
        %874 = vmatprep.subr.mxu0 0.0
        %875 = vmatpush1.xpose.msra.mxu0 0.0
        %876 = vmatprep.subr.mxu0 0.0
        %877 = vmatpush1.xpose.msra.mxu0 0.0
        %878 = vmatprep.subr.mxu0 0.0
        %879 = vmatpush1.xpose.msra.mxu0 0.0
        %880 = vmatprep.subr.mxu0 0.0
        %881 = vmatpush1.xpose.msra.mxu0 0.0
        %882 = vmatprep.subr.mxu0 0.0
        %883 = vmatpush1.xpose.msra.mxu0 0.0
        %884 = vmatprep.subr.mxu0 0.0
        %885 = vmatpush1.xpose.msra.mxu0 0.0
        %886 = vmatprep.subr.mxu0 0.0
        %887 = vmatpush1.xpose.msra.mxu0 0.0
        %888 = vmatprep.subr.mxu0 0.0
        %889 = vmatpush1.xpose.msra.mxu0 0.0
        %890 = vmatprep.subr.mxu0 0.0
        %891 = vmatpush1.xpose.msra.mxu0 0.0
        %892 = vmatprep.subr.mxu0 0.0
        %893 = vmatpush1.xpose.msra.mxu0 0.0
        %894 = vmatprep.subr.mxu0 0.0
        %895 = vmatpush1.xpose.msra.mxu0 0.0
        %896 = vmatprep.subr.mxu0 0.0
        %897 = vmatpush1.xpose.msra.mxu0 0.0
        %898 = vmatprep.subr.mxu0 0.0
        %899 = vmatpush1.xpose.msra.mxu0 0.0
        %900 = vmatprep.subr.mxu0 0.0
        %901 = vmatpush1.xpose.msra.mxu0 0.0
        %902 = vmatprep.subr.mxu0 0.0
        %903 = vmatpush1.xpose.msra.mxu0 0.0
        %904 = vmatprep.subr.mxu0 0.0
        %905 = vmatpush1.xpose.msra.mxu0 0.0
        %906 = vmatprep.subr.mxu0 0.0
        %907 = vmatpush1.xpose.msra.mxu0 0.0
        %908 = vmatprep.subr.mxu0 0.0
        %909 = vmatpush1.xpose.msra.mxu0 0.0
        %910 = vmatprep.subr.mxu0 0.0
        %911 = vmatpush1.xpose.msra.mxu0 0.0
        %912 = vmatprep.subr.mxu0 0.0
        %913 = vmatpush1.xpose.msra.mxu0 0.0
        %914 = vmatprep.subr.mxu0 0.0
        %915 = vmatpush1.xpose.msra.mxu0 0.0
        %916 = vmatprep.subr.mxu0 0.0
        %917 = vmatpush1.xpose.msra.mxu0 0.0
        %918 = vmatprep.subr.mxu0 0.0
        %919 = vmatpush1.xpose.msra.mxu0 0.0
        %920 = vmatprep.subr.mxu0 0.0
        %921 = vmatpush1.xpose.msra.mxu0 0.0
        %922 = vmatprep.mubr.f32.mxu0 0.0
        %923 = vmatmul.mubr.f32.gmra.mrb[0].mxu0 %v854
        %v924 = vpop.f32.mrb[0].mxu0
        %v925 = vadd.f32 0.0, %v924
        %v926 = vpop.f32.mrb[0].mxu0
        %927 = vdwg.mxu0
        %v928 = vmul.f32 %v925, 0.35355338
        %v929 = vsel %vm363, %v928, -1e+30
        %v930 = vsel %vm367, %v929, -inf
        %931 = vmax.xlane.f32.xlu0 %v930
        %v932 = vpop.xlane.xlu0 %931
        %v933 = vsub.f32 %v929, %v932
        %v934 = vmul.f32 %v933, 1.442695
        %v935 = vpow.pop %v934
        %v936 = vsel %vm367, %v935, 0.0
        %937 = vadd.xlane.f32.xlu0 %v936
        %v938 = vpop.xlane.xlu0 %937
        %v939 = vrcp.pop %v938
        %v940 = vmul.f32 %v938, %v939
        %v941 = vsub.f32 2.0, %v940
        %v942 = vmul.f32 %v939, %v941
        %v943 = vmul.f32 %v935, %v942
        %944 = vrot.lane.b32.xlu0 %v356, 48
        %v945 = vpop.permute.xlu0 %944
        %v948 = vsel %vm367, %v943, 0
        %950 = vmatprep.subr.mxu0 0.0
        %951 = vmatpush1.msra.mxu0 %v945
        %952 = vmatprep.subr.mxu0 0.0
        %953 = vmatpush1.msra.mxu0 0.0
        %954 = vmatprep.subr.mxu0 0.0
        %955 = vmatpush1.msra.mxu0 0.0
        %956 = vmatprep.subr.mxu0 0.0
        %957 = vmatpush1.msra.mxu0 0.0
        %958 = vmatprep.subr.mxu0 0.0
        %959 = vmatpush1.msra.mxu0 0.0
        %960 = vmatprep.subr.mxu0 0.0
        %961 = vmatpush1.msra.mxu0 0.0
        %962 = vmatprep.subr.mxu0 0.0
        %963 = vmatpush1.msra.mxu0 0.0
        %964 = vmatprep.subr.mxu0 0.0
        %965 = vmatpush1.msra.mxu0 0.0
        %966 = vmatprep.subr.mxu0 0.0
        %967 = vmatpush1.msra.mxu0 0.0
        %968 = vmatprep.subr.mxu0 0.0
        %969 = vmatpush1.msra.mxu0 0.0
        %970 = vmatprep.subr.mxu0 0.0
        %971 = vmatpush1.msra.mxu0 0.0
        %972 = vmatprep.subr.mxu0 0.0
        %973 = vmatpush1.msra.mxu0 0.0
        %974 = vmatprep.subr.mxu0 0.0
        %975 = vmatpush1.msra.mxu0 0.0
        %976 = vmatprep.subr.mxu0 0.0
        %977 = vmatpush1.msra.mxu0 0.0
        %978 = vmatprep.subr.mxu0 0.0
        %979 = vmatpush1.msra.mxu0 0.0
        %980 = vmatprep.subr.mxu0 0.0
        %981 = vmatpush1.msra.mxu0 0.0
        %982 = vmatprep.subr.mxu0 0.0
        %983 = vmatpush1.msra.mxu0 0.0
        %984 = vmatprep.subr.mxu0 0.0
        %985 = vmatpush1.msra.mxu0 0.0
        %986 = vmatprep.subr.mxu0 0.0
        %987 = vmatpush1.msra.mxu0 0.0
        %988 = vmatprep.subr.mxu0 0.0
        %989 = vmatpush1.msra.mxu0 0.0
        %990 = vmatprep.subr.mxu0 0.0
        %991 = vmatpush1.msra.mxu0 0.0
        %992 = vmatprep.subr.mxu0 0.0
        %993 = vmatpush1.msra.mxu0 0.0
        %994 = vmatprep.subr.mxu0 0.0
        %995 = vmatpush1.msra.mxu0 0.0
        %996 = vmatprep.subr.mxu0 0.0
        %997 = vmatpush1.msra.mxu0 0.0
        %998 = vmatprep.subr.mxu0 0.0
        %999 = vmatpush1.msra.mxu0 0.0
        %1000 = vmatprep.subr.mxu0 0.0
        %1001 = vmatpush1.msra.mxu0 0.0
        %1002 = vmatprep.subr.mxu0 0.0
        %1003 = vmatpush1.msra.mxu0 0.0
        %1004 = vmatprep.subr.mxu0 0.0
        %1005 = vmatpush1.msra.mxu0 0.0
        %1006 = vmatprep.subr.mxu0 0.0
        %1007 = vmatpush1.msra.mxu0 0.0
        %1008 = vmatprep.subr.mxu0 0.0
        %1009 = vmatpush1.msra.mxu0 0.0
        %1010 = vmatprep.subr.mxu0 0.0
        %1011 = vmatpush1.msra.mxu0 0.0
        %1012 = vmatprep.subr.mxu0 0.0
        %1013 = vmatpush1.msra.mxu0 0.0
        %1014 = vmatprep.mubr.f32.mxu0 0.0
        %1015 = vmatmul.mubr.f32.gmra.mrb[0].mxu0 %v948
        %v1016 = vpop.f32.mrb[0].mxu0
        %v1017 = vadd.f32 0.0, %v1016
        %v1018 = vpop.f32.mrb[0].mxu0
        %1019 = vdwg.mxu0
        %v1021 = vsel %vm367, %v1017, 0
        %1023 = vmatprep.subr.mxu0 0.0
        %1024 = vmatpush1.msra.mxu0 %v276
        %1025 = vmatprep.subr.mxu0 0.0
        %1026 = vmatpush1.msra.mxu0 0.0
        %1027 = vmatprep.subr.mxu0 0.0
        %1028 = vmatpush1.msra.mxu0 0.0
        %1029 = vmatprep.subr.mxu0 0.0
        %1030 = vmatpush1.msra.mxu0 0.0
        %1031 = vmatprep.subr.mxu0 0.0
        %1032 = vmatpush1.msra.mxu0 0.0
        %1033 = vmatprep.subr.mxu0 0.0
        %1034 = vmatpush1.msra.mxu0 0.0
        %1035 = vmatprep.subr.mxu0 0.0
        %1036 = vmatpush1.msra.mxu0 0.0
        %1037 = vmatprep.subr.mxu0 0.0
        %1038 = vmatpush1.msra.mxu0 0.0
        %1039 = vmatprep.subr.mxu0 0.0
        %1040 = vmatpush1.msra.mxu0 0.0
        %1041 = vmatprep.subr.mxu0 0.0
        %1042 = vmatpush1.msra.mxu0 0.0
        %1043 = vmatprep.subr.mxu0 0.0
        %1044 = vmatpush1.msra.mxu0 0.0
        %1045 = vmatprep.subr.mxu0 0.0
        %1046 = vmatpush1.msra.mxu0 0.0
        %1047 = vmatprep.subr.mxu0 0.0
        %1048 = vmatpush1.msra.mxu0 0.0
        %1049 = vmatprep.subr.mxu0 0.0
        %1050 = vmatpush1.msra.mxu0 0.0
        %1051 = vmatprep.subr.mxu0 0.0
        %1052 = vmatpush1.msra.mxu0 0.0
        %1053 = vmatprep.subr.mxu0 0.0
        %1054 = vmatpush1.msra.mxu0 0.0
        %1055 = vmatprep.subr.mxu0 0.0
        %1056 = vmatpush1.msra.mxu0 0.0
        %1057 = vmatprep.subr.mxu0 0.0
        %1058 = vmatpush1.msra.mxu0 0.0
        %1059 = vmatprep.subr.mxu0 0.0
        %1060 = vmatpush1.msra.mxu0 0.0
        %1061 = vmatprep.subr.mxu0 0.0
        %1062 = vmatpush1.msra.mxu0 0.0
        %1063 = vmatprep.subr.mxu0 0.0
        %1064 = vmatpush1.msra.mxu0 0.0
        %1065 = vmatprep.subr.mxu0 0.0
        %1066 = vmatpush1.msra.mxu0 0.0
        %1067 = vmatprep.subr.mxu0 0.0
        %1068 = vmatpush1.msra.mxu0 0.0
        %1069 = vmatprep.subr.mxu0 0.0
        %1070 = vmatpush1.msra.mxu0 0.0
        %1071 = vmatprep.subr.mxu0 0.0
        %1072 = vmatpush1.msra.mxu0 0.0
        %1073 = vmatprep.subr.mxu0 0.0
        %1074 = vmatpush1.msra.mxu0 0.0
        %1075 = vmatprep.subr.mxu0 0.0
        %1076 = vmatpush1.msra.mxu0 0.0
        %1077 = vmatprep.subr.mxu0 0.0
        %1078 = vmatpush1.msra.mxu0 0.0
        %1079 = vmatprep.subr.mxu0 0.0
        %1080 = vmatpush1.msra.mxu0 0.0
        %1081 = vmatprep.subr.mxu0 0.0
        %1082 = vmatpush1.msra.mxu0 0.0
        %1083 = vmatprep.subr.mxu0 0.0
        %1084 = vmatpush1.msra.mxu0 0.0
        %1085 = vmatprep.subr.mxu0 0.0
        %1086 = vmatpush1.msra.mxu0 0.0
        %1087 = vmatprep.mubr.f32.mxu0 0.0
        %1088 = vmatmul.mubr.f32.gmra.mrb[0].mxu0 %v1021
        %v1089 = vpop.f32.mrb[0].mxu0
        %v1090 = vadd.f32 0.0, %v1089
        %v1091 = vpop.f32.mrb[0].mxu0
        %1092 = vdwg.mxu0
        %v1093 = vadd.f32 %v847, %v1090
        %1094 = vrot.lane.b32.xlu0 %v356, 104
        %v1095 = vpop.permute.xlu0 %1094
        %1096 = vrot.lane.b32.xlu0 %v356, 72
        %v1097 = vpop.permute.xlu0 %1096
        %v1098 = vsel %vm367, %v1095, 0
        %v1100 = vsel %vm367, %v1097, 0
        %1102 = vmatprep.subr.mxu0 0.0
        %1103 = vmatpush1.xpose.msra.mxu0 %v1100
        %1104 = vmatprep.subr.mxu0 0.0
        %1105 = vmatpush1.xpose.msra.mxu0 0.0
        %1106 = vmatprep.subr.mxu0 0.0
        %1107 = vmatpush1.xpose.msra.mxu0 0.0
        %1108 = vmatprep.subr.mxu0 0.0
        %1109 = vmatpush1.xpose.msra.mxu0 0.0
        %1110 = vmatprep.subr.mxu0 0.0
        %1111 = vmatpush1.xpose.msra.mxu0 0.0
        %1112 = vmatprep.subr.mxu0 0.0
        %1113 = vmatpush1.xpose.msra.mxu0 0.0
        %1114 = vmatprep.subr.mxu0 0.0
        %1115 = vmatpush1.xpose.msra.mxu0 0.0
        %1116 = vmatprep.subr.mxu0 0.0
        %1117 = vmatpush1.xpose.msra.mxu0 0.0
        %1118 = vmatprep.subr.mxu0 0.0
        %1119 = vmatpush1.xpose.msra.mxu0 0.0
        %1120 = vmatprep.subr.mxu0 0.0
        %1121 = vmatpush1.xpose.msra.mxu0 0.0
        %1122 = vmatprep.subr.mxu0 0.0
        %1123 = vmatpush1.xpose.msra.mxu0 0.0
        %1124 = vmatprep.subr.mxu0 0.0
        %1125 = vmatpush1.xpose.msra.mxu0 0.0
        %1126 = vmatprep.subr.mxu0 0.0
        %1127 = vmatpush1.xpose.msra.mxu0 0.0
        %1128 = vmatprep.subr.mxu0 0.0
        %1129 = vmatpush1.xpose.msra.mxu0 0.0
        %1130 = vmatprep.subr.mxu0 0.0
        %1131 = vmatpush1.xpose.msra.mxu0 0.0
        %1132 = vmatprep.subr.mxu0 0.0
        %1133 = vmatpush1.xpose.msra.mxu0 0.0
        %1134 = vmatprep.subr.mxu0 0.0
        %1135 = vmatpush1.xpose.msra.mxu0 0.0
        %1136 = vmatprep.subr.mxu0 0.0
        %1137 = vmatpush1.xpose.msra.mxu0 0.0
        %1138 = vmatprep.subr.mxu0 0.0
        %1139 = vmatpush1.xpose.msra.mxu0 0.0
        %1140 = vmatprep.subr.mxu0 0.0
        %1141 = vmatpush1.xpose.msra.mxu0 0.0
        %1142 = vmatprep.subr.mxu0 0.0
        %1143 = vmatpush1.xpose.msra.mxu0 0.0
        %1144 = vmatprep.subr.mxu0 0.0
        %1145 = vmatpush1.xpose.msra.mxu0 0.0
        %1146 = vmatprep.subr.mxu0 0.0
        %1147 = vmatpush1.xpose.msra.mxu0 0.0
        %1148 = vmatprep.subr.mxu0 0.0
        %1149 = vmatpush1.xpose.msra.mxu0 0.0
        %1150 = vmatprep.subr.mxu0 0.0
        %1151 = vmatpush1.xpose.msra.mxu0 0.0
        %1152 = vmatprep.subr.mxu0 0.0
        %1153 = vmatpush1.xpose.msra.mxu0 0.0
        %1154 = vmatprep.subr.mxu0 0.0
        %1155 = vmatpush1.xpose.msra.mxu0 0.0
        %1156 = vmatprep.subr.mxu0 0.0
        %1157 = vmatpush1.xpose.msra.mxu0 0.0
        %1158 = vmatprep.subr.mxu0 0.0
        %1159 = vmatpush1.xpose.msra.mxu0 0.0
        %1160 = vmatprep.subr.mxu0 0.0
        %1161 = vmatpush1.xpose.msra.mxu0 0.0
        %1162 = vmatprep.subr.mxu0 0.0
        %1163 = vmatpush1.xpose.msra.mxu0 0.0
        %1164 = vmatprep.subr.mxu0 0.0
        %1165 = vmatpush1.xpose.msra.mxu0 0.0
        %1166 = vmatprep.mubr.f32.mxu0 0.0
        %1167 = vmatmul.mubr.f32.gmra.mrb[0].mxu0 %v1098
        %v1168 = vpop.f32.mrb[0].mxu0
        %v1169 = vadd.f32 0.0, %v1168
        %v1170 = vpop.f32.mrb[0].mxu0
        %1171 = vdwg.mxu0
        %v1172 = vmul.f32 %v1169, 0.35355338
        %v1173 = vsel %vm363, %v1172, -1e+30
        %v1174 = vsel %vm367, %v1173, -inf
        %1175 = vmax.xlane.f32.xlu0 %v1174
        %v1176 = vpop.xlane.xlu0 %1175
        %v1177 = vsub.f32 %v1173, %v1176
        %v1178 = vmul.f32 %v1177, 1.442695
        %v1179 = vpow.pop %v1178
        %v1180 = vsel %vm367, %v1179, 0.0
        %1181 = vadd.xlane.f32.xlu0 %v1180
        %v1182 = vpop.xlane.xlu0 %1181
        %v1183 = vrcp.pop %v1182
        %v1184 = vmul.f32 %v1182, %v1183
        %v1185 = vsub.f32 2.0, %v1184
        %v1186 = vmul.f32 %v1183, %v1185
        %v1187 = vmul.f32 %v1179, %v1186
        %1188 = vrot.lane.b32.xlu0 %v356, 40
        %v1189 = vpop.permute.xlu0 %1188
        %v1192 = vsel %vm367, %v1187, 0
        %1194 = vmatprep.subr.mxu0 0.0
        %1195 = vmatpush1.msra.mxu0 %v1189
        %1196 = vmatprep.subr.mxu0 0.0
        %1197 = vmatpush1.msra.mxu0 0.0
        %1198 = vmatprep.subr.mxu0 0.0
        %1199 = vmatpush1.msra.mxu0 0.0
        %1200 = vmatprep.subr.mxu0 0.0
        %1201 = vmatpush1.msra.mxu0 0.0
        %1202 = vmatprep.subr.mxu0 0.0
        %1203 = vmatpush1.msra.mxu0 0.0
        %1204 = vmatprep.subr.mxu0 0.0
        %1205 = vmatpush1.msra.mxu0 0.0
        %1206 = vmatprep.subr.mxu0 0.0
        %1207 = vmatpush1.msra.mxu0 0.0
        %1208 = vmatprep.subr.mxu0 0.0
        %1209 = vmatpush1.msra.mxu0 0.0
        %1210 = vmatprep.subr.mxu0 0.0
        %1211 = vmatpush1.msra.mxu0 0.0
        %1212 = vmatprep.subr.mxu0 0.0
        %1213 = vmatpush1.msra.mxu0 0.0
        %1214 = vmatprep.subr.mxu0 0.0
        %1215 = vmatpush1.msra.mxu0 0.0
        %1216 = vmatprep.subr.mxu0 0.0
        %1217 = vmatpush1.msra.mxu0 0.0
        %1218 = vmatprep.subr.mxu0 0.0
        %1219 = vmatpush1.msra.mxu0 0.0
        %1220 = vmatprep.subr.mxu0 0.0
        %1221 = vmatpush1.msra.mxu0 0.0
        %1222 = vmatprep.subr.mxu0 0.0
        %1223 = vmatpush1.msra.mxu0 0.0
        %1224 = vmatprep.subr.mxu0 0.0
        %1225 = vmatpush1.msra.mxu0 0.0
        %1226 = vmatprep.subr.mxu0 0.0
        %1227 = vmatpush1.msra.mxu0 0.0
        %1228 = vmatprep.subr.mxu0 0.0
        %1229 = vmatpush1.msra.mxu0 0.0
        %1230 = vmatprep.subr.mxu0 0.0
        %1231 = vmatpush1.msra.mxu0 0.0
        %1232 = vmatprep.subr.mxu0 0.0
        %1233 = vmatpush1.msra.mxu0 0.0
        %1234 = vmatprep.subr.mxu0 0.0
        %1235 = vmatpush1.msra.mxu0 0.0
        %1236 = vmatprep.subr.mxu0 0.0
        %1237 = vmatpush1.msra.mxu0 0.0
        %1238 = vmatprep.subr.mxu0 0.0
        %1239 = vmatpush1.msra.mxu0 0.0
        %1240 = vmatprep.subr.mxu0 0.0
        %1241 = vmatpush1.msra.mxu0 0.0
        %1242 = vmatprep.subr.mxu0 0.0
        %1243 = vmatpush1.msra.mxu0 0.0
        %1244 = vmatprep.subr.mxu0 0.0
        %1245 = vmatpush1.msra.mxu0 0.0
        %1246 = vmatprep.subr.mxu0 0.0
        %1247 = vmatpush1.msra.mxu0 0.0
        %1248 = vmatprep.subr.mxu0 0.0
        %1249 = vmatpush1.msra.mxu0 0.0
        %1250 = vmatprep.subr.mxu0 0.0
        %1251 = vmatpush1.msra.mxu0 0.0
        %1252 = vmatprep.subr.mxu0 0.0
        %1253 = vmatpush1.msra.mxu0 0.0
        %1254 = vmatprep.subr.mxu0 0.0
        %1255 = vmatpush1.msra.mxu0 0.0
        %1256 = vmatprep.subr.mxu0 0.0
        %1257 = vmatpush1.msra.mxu0 0.0
        %1258 = vmatprep.mubr.f32.mxu0 0.0
        %1259 = vmatmul.mubr.f32.gmra.mrb[0].mxu0 %v1192
        %v1260 = vpop.f32.mrb[0].mxu0
        %v1261 = vadd.f32 0.0, %v1260
        %v1262 = vpop.f32.mrb[0].mxu0
        %1263 = vdwg.mxu0
        %v1265 = vsel %vm367, %v1261, 0
        %1267 = vmatprep.subr.mxu0 0.0
        %1268 = vmatpush1.msra.mxu0 %v277
        %1269 = vmatprep.subr.mxu0 0.0
        %1270 = vmatpush1.msra.mxu0 0.0
        %1271 = vmatprep.subr.mxu0 0.0
        %1272 = vmatpush1.msra.mxu0 0.0
        %1273 = vmatprep.subr.mxu0 0.0
        %1274 = vmatpush1.msra.mxu0 0.0
        %1275 = vmatprep.subr.mxu0 0.0
        %1276 = vmatpush1.msra.mxu0 0.0
        %1277 = vmatprep.subr.mxu0 0.0
        %1278 = vmatpush1.msra.mxu0 0.0
        %1279 = vmatprep.subr.mxu0 0.0
        %1280 = vmatpush1.msra.mxu0 0.0
        %1281 = vmatprep.subr.mxu0 0.0
        %1282 = vmatpush1.msra.mxu0 0.0
        %1283 = vmatprep.subr.mxu0 0.0
        %1284 = vmatpush1.msra.mxu0 0.0
        %1285 = vmatprep.subr.mxu0 0.0
        %1286 = vmatpush1.msra.mxu0 0.0
        %1287 = vmatprep.subr.mxu0 0.0
        %1288 = vmatpush1.msra.mxu0 0.0
        %1289 = vmatprep.subr.mxu0 0.0
        %1290 = vmatpush1.msra.mxu0 0.0
        %1291 = vmatprep.subr.mxu0 0.0
        %1292 = vmatpush1.msra.mxu0 0.0
        %1293 = vmatprep.subr.mxu0 0.0
        %1294 = vmatpush1.msra.mxu0 0.0
        %1295 = vmatprep.subr.mxu0 0.0
        %1296 = vmatpush1.msra.mxu0 0.0
        %1297 = vmatprep.subr.mxu0 0.0
        %1298 = vmatpush1.msra.mxu0 0.0
        %1299 = vmatprep.subr.mxu0 0.0
        %1300 = vmatpush1.msra.mxu0 0.0
        %1301 = vmatprep.subr.mxu0 0.0
        %1302 = vmatpush1.msra.mxu0 0.0
        %1303 = vmatprep.subr.mxu0 0.0
        %1304 = vmatpush1.msra.mxu0 0.0
        %1305 = vmatprep.subr.mxu0 0.0
        %1306 = vmatpush1.msra.mxu0 0.0
        %1307 = vmatprep.subr.mxu0 0.0
        %1308 = vmatpush1.msra.mxu0 0.0
        %1309 = vmatprep.subr.mxu0 0.0
        %1310 = vmatpush1.msra.mxu0 0.0
        %1311 = vmatprep.subr.mxu0 0.0
        %1312 = vmatpush1.msra.mxu0 0.0
        %1313 = vmatprep.subr.mxu0 0.0
        %1314 = vmatpush1.msra.mxu0 0.0
        %1315 = vmatprep.subr.mxu0 0.0
        %1316 = vmatpush1.msra.mxu0 0.0
        %1317 = vmatprep.subr.mxu0 0.0
        %1318 = vmatpush1.msra.mxu0 0.0
        %1319 = vmatprep.subr.mxu0 0.0
        %1320 = vmatpush1.msra.mxu0 0.0
        %1321 = vmatprep.subr.mxu0 0.0
        %1322 = vmatpush1.msra.mxu0 0.0
        %1323 = vmatprep.subr.mxu0 0.0
        %1324 = vmatpush1.msra.mxu0 0.0
        %1325 = vmatprep.subr.mxu0 0.0
        %1326 = vmatpush1.msra.mxu0 0.0
        %1327 = vmatprep.subr.mxu0 0.0
        %1328 = vmatpush1.msra.mxu0 0.0
        %1329 = vmatprep.subr.mxu0 0.0
        %1330 = vmatpush1.msra.mxu0 0.0
        %1331 = vmatprep.mubr.f32.mxu0 0.0
        %1332 = vmatmul.mubr.f32.gmra.mrb[0].mxu0 %v1265
        %v1333 = vpop.f32.mrb[0].mxu0
        %v1334 = vadd.f32 0.0, %v1333
        %v1335 = vpop.f32.mrb[0].mxu0
        %1336 = vdwg.mxu0
        %v1337 = vadd.f32 %v1093, %v1334
        %v1338 = vld [vmem:[%s4] sm:$0x1]
        %v1340 = vlaneseq
        %v1341 = vshrl.u32 %v1340, 7
        %v1342 = vsub.s32 0, %v1341
        %v1343 = vrot.slane %v1338, %v1342
        %v1345 = vadd.f32 %v1337, %v1343
        %1346 = vst.msk [vmem:[%s268] sm:$0xff] %vm285, %v1345
        %s1347 = sand.u32 %s141, 1
        %s1348 = scalar_lea.sflag [#allocation4], %s1347
        %s1349 = sand.u32 %s141, 1
        %s1350 = smul.addr %s1349, 8
        %s1351 = scalar_lea.vmem [#allocation8], %s1350
        // Predicated region
        $region53: #{tpu_custom_call.1} parent=39 // pred_check
          %p1352 = pneg %p151
        $region54: #{tpu_custom_call.1} parent=39 // pred_check_branch
          %1354 = sbr.rel (%p1352) target = $region56
        $region55: #{tpu_custom_call.1} parent=39 // pred_region
          %s1356 = ssub.s32 128, 128
          %1357 = vsyncadd %s1348, %s1356
          %s1358 = smul.addr %s23, 128
          %s1359 = scalar_lea.hbm %s5, %s1358
          %s1361 = sshll.u32 %s1351, 4
          %s1362 = int_to_ptr.vmem [resolvable:$true] %s1361
          %1364 = dma.vmem_to_hbm [thread:$0]  %s1362, 128, %s1359, %s1348
        $region56: #{tpu_custom_call.1} parent=39 // pred_fallthru
          _
      $region40: #{tpu_custom_call.1} parent=5 // pred_fallthru
        _
      %p1365 = scmp.le.s32.totalorder 2, %s18
      // Predicated region
      $region57: #{tpu_custom_call.1} parent=5 // pred_check
        %p1366 = pneg %p1365
      $region58: #{tpu_custom_call.1} parent=5 // pred_check_branch
        %1368 = sbr.rel (%p1366) target = $region60
      $region59: #{tpu_custom_call.1} parent=5 // pred_region
        %s1369 = ssub.s32 %s18, 2
        // Predicated region
        $region61: #{tpu_custom_call.1} parent=59 // pred_check
          %p1370 = pneg %p157
        $region62: #{tpu_custom_call.1} parent=59 // pred_check_branch
          %1372 = sbr.rel (%p1370) target = $region64
        $region63: #{tpu_custom_call.1} parent=59 // pred_region
          %s1373 = sand.u32 %s142, 1
          %s1374 = scalar_lea.sflag [#allocation4], %s1373
          %s1375 = sand.u32 %s142, 1
          %s1376 = smul.addr %s1375, 8
          %s1377 = scalar_lea.vmem [#allocation8], %s1376
          %1378 = dma.done %s1374, 128
        $region64: #{tpu_custom_call.1} parent=59 // pred_fallthru
          _
      $region60: #{tpu_custom_call.1} parent=5 // pred_fallthru
        _
    $region6: #{tpu_custom_call.1} parent=1 // loop_footer
      %s22 = sadd.s32 1, %s18
    $region7: #{tpu_custom_call.1} parent=1 // loop_footer_branch
      %17 = sbr.rel target = $region3
    $region8: #{tpu_custom_call.1} parent=1 // loop_exit
      _
    %1379 = vsyncpa [#allocation3], 1
    %s1380 = scalar_lea.sflag [#allocation3], 1
    %1381 = vsyncpa %s1380, 1
    %1382 = vsyncpa [#allocation6], 1
    %1383 = vsyncpa [#allocation4], 1
    %s1384 = scalar_lea.sflag [#allocation4], 1
    %1385 = vsyncpa %s1384, 1

</llo_original>
